<compile_context>
chip_gen: v6e
topology: v6e:2x2x1
jax: 0.10.0
libtpu: 0.0.40
codegen_flags: <defaults>
</compile_context>

<pallas_src>
import math

import jax
import jax.numpy as jnp
from jax import lax
from jax.experimental import pallas as pl
from jax.experimental.pallas import tpu as pltpu


def bilstm_kernel(x_ref, wih_ref, b_ref, whh_f_ref, whh_r_ref,
                  out_f_ref, out_b_ref, xp_f_ref, xp_b_ref):
    """Fused bidirectional LSTM for one batch block, whole sequence in VMEM."""
    T, B, D = x_ref.shape            # time-major block: (T, B_blk, D)
    H = whh_f_ref.shape[0]
    G = 4 * H                        # per-direction gate width (lane aligned: 128)

    # ---- Hoisted input projection: one big lane-dense matmul ---------------
    # (T*B, D) @ (D, 8H) + bias, split into fwd / bwd halves (128-aligned).
    x2d = x_ref[...].reshape(T * B, D).astype(jnp.float32)
    xp = jnp.dot(x2d, wih_ref[...], preferred_element_type=jnp.float32) + b_ref[...]
    xp_f_ref[...] = xp[:, :G].reshape(T, B, G)
    xp_b_ref[...] = xp[:, G:].reshape(T, B, G)

    whh_f = whh_f_ref[...]
    whh_r = whh_r_ref[...]

    def gates_to_hc(gates, c):
        # PyTorch gate order i, f, g, o.  4H = 128 lanes; per-gate 32-lane
        # slices accepted (H < 128).
        i = jax.nn.sigmoid(gates[:, 0 * H:1 * H])
        f = jax.nn.sigmoid(gates[:, 1 * H:2 * H])
        g = jnp.tanh(gates[:, 2 * H:3 * H])
        o = jax.nn.sigmoid(gates[:, 3 * H:4 * H])
        c_new = f * c + i * g
        h_new = o * jnp.tanh(c_new)
        return h_new, c_new

    # ---- Fused fwd/bwd recurrence: two independent carries in one loop -----
    def body(t, carry):
        h_f, c_f, h_b, c_b = carry
        tt = T - 1 - t
        gates_f = xp_f_ref[t] + jnp.dot(h_f, whh_f,
                                        preferred_element_type=jnp.float32)
        gates_b = xp_b_ref[tt] + jnp.dot(h_b, whh_r,
                                         preferred_element_type=jnp.float32)
        h_f, c_f = gates_to_hc(gates_f, c_f)
        h_b, c_b = gates_to_hc(gates_b, c_b)
        out_f_ref[t] = h_f            # plain VMEM stores, no carried (T,B,H)
        out_b_ref[tt] = h_b
        return h_f, c_f, h_b, c_b

    z = jnp.zeros((B, H), jnp.float32)
    lax.fori_loop(0, T, body, (z, z, z, z), unroll=True)


def birnn_forward(x, params, b_blk=8):
    """x: (B, T, in_dim) batch-first.  Returns (B, T, 2*hid_dim)."""
    B, T, D = x.shape
    H = params["whh_f"].shape[0]

    # Pad batch to a multiple of 8 sublanes (and of the grid block).
    B_pad = ((B + b_blk - 1) // b_blk) * b_blk
    x_tm = jnp.transpose(x, (1, 0, 2)).astype(jnp.float32)      # (T, B, D)
    if B_pad != B:
        x_tm = jnp.pad(x_tm, ((0, 0), (0, B_pad - B), (0, 0)))

    # Concatenate both directions' input weights / biases -> one projection.
    wih_cat = jnp.concatenate([params["wih_f"], params["wih_r"]], axis=1)  # (D, 8H)
    b_cat = jnp.concatenate([params["b_f"], params["b_r"]], axis=1)        # (1, 8H)

    grid = (B_pad // b_blk,)
    out_f, out_b = pl.pallas_call(
        bilstm_kernel,
        out_shape=(jax.ShapeDtypeStruct((T, B_pad, H), jnp.float32),
                   jax.ShapeDtypeStruct((T, B_pad, H), jnp.float32)),
        grid=grid,
        in_specs=[
            pl.BlockSpec((T, b_blk, D), lambda b: (0, b, 0)),
            pl.BlockSpec((D, 8 * H), lambda b: (0, 0)),
            pl.BlockSpec((1, 8 * H), lambda b: (0, 0)),
            pl.BlockSpec((H, 4 * H), lambda b: (0, 0)),
            pl.BlockSpec((H, 4 * H), lambda b: (0, 0)),
        ],
        out_specs=(pl.BlockSpec((T, b_blk, H), lambda b: (0, b, 0)),
                   pl.BlockSpec((T, b_blk, H), lambda b: (0, b, 0))),
        scratch_shapes=[pltpu.VMEM((T, b_blk, 4 * H), jnp.float32),
                        pltpu.VMEM((T, b_blk, 4 * H), jnp.float32)],
        compiler_params=pltpu.CompilerParams(
            dimension_semantics=("parallel",)),   # batch blocks -> both v7x TCs
    )(x_tm, wih_cat, b_cat, params["whh_f"], params["whh_r"])

    # PyTorch bidirectional output: concat(forward, backward) on feature dim.
    out_tm = jnp.concatenate([out_f, out_b], axis=-1)            # (T, B_pad, 2H)
    return jnp.transpose(out_tm, (1, 0, 2))[:B]                  # (B, T, 2H)


def init_params(key, in_dim, hid_dim):
    """Deterministic synthetic LSTM params (PyTorch-style uniform init)."""
    k = 1.0 / math.sqrt(hid_dim)
    keys = jax.random.split(key, 8)

    def u(kk, shape):
        return jax.random.uniform(kk, shape, jnp.float32, minval=-k, maxval=k)

    # stored pre-transposed: (in_dim, 4H) and (H, 4H); bias = b_ih + b_hh
    return {
        "wih_f": u(keys[0], (in_dim, 4 * hid_dim)),
        "whh_f": u(keys[1], (hid_dim, 4 * hid_dim)),
        "b_f":   u(keys[2], (1, 4 * hid_dim)) + u(keys[3], (1, 4 * hid_dim)),
        "wih_r": u(keys[4], (in_dim, 4 * hid_dim)),
        "whh_r": u(keys[5], (hid_dim, 4 * hid_dim)),
        "b_r":   u(keys[6], (1, 4 * hid_dim)) + u(keys[7], (1, 4 * hid_dim)),
    }


def birnn_reference(x, params):
    """Pure-JAX reference for correctness checking."""
    def run_dir(x_tm, wih, whh, b, reverse):
        T, B, _ = x_tm.shape
        H = whh.shape[0]
        xs = x_tm[::-1] if reverse else x_tm

        def step(carry, x_t):
            h, c = carry
            gates = x_t @ wih + h @ whh + b
            i = jax.nn.sigmoid(gates[:, 0 * H:1 * H])
            f = jax.nn.sigmoid(gates[:, 1 * H:2 * H])
            g = jnp.tanh(gates[:, 2 * H:3 * H])
            o = jax.nn.sigmoid(gates[:, 3 * H:4 * H])
            c = f * c + i * g
            h = o * jnp.tanh(c)
            return (h, c), h

        h0 = jnp.zeros((B, H), jnp.float32)
        _, hs = lax.scan(step, (h0, h0), xs)
        return hs[::-1] if reverse else hs

    x_tm = jnp.transpose(x, (1, 0, 2))
    out_f = run_dir(x_tm, params["wih_f"], params["whh_f"], params["b_f"], False)
    out_b = run_dir(x_tm, params["wih_r"], params["whh_r"], params["b_r"], True)
    return jnp.transpose(jnp.concatenate([out_f, out_b], axis=-1), (1, 0, 2))


if __name__ == "__main__":
    B, T, IN_DIM, HID_DIM = 2, 8, 16, 32

    key = jax.random.PRNGKey(0)
    kx, kp = jax.random.split(key)
    x = jax.random.normal(kx, (B, T, IN_DIM), jnp.float32)
    params = init_params(kp, IN_DIM, HID_DIM)

    out = birnn_forward(x, params)
    out = jax.block_until_ready(out)

    ref = birnn_reference(x, params)
    assert out.shape == (B, T, 2 * HID_DIM)
    assert jnp.allclose(out, ref, atol=1e-5, rtol=1e-5)

    print("KERNEL_OK")
</pallas_src>

<mosaic_0001>
module attributes {stable_mosaic.version = 11 : i64} {
  func.func @bilstm_kernel(%arg0: i32, %arg1: memref<8x8x16xf32, #tpu.memory_space<vmem>>, %arg2: memref<16x256xf32, #tpu.memory_space<vmem>>, %arg3: memref<1x256xf32, #tpu.memory_space<vmem>>, %arg4: memref<32x128xf32, #tpu.memory_space<vmem>>, %arg5: memref<32x128xf32, #tpu.memory_space<vmem>>, %arg6: memref<8x8x32xf32, #tpu.memory_space<vmem>>, %arg7: memref<8x8x32xf32, #tpu.memory_space<vmem>>, %arg8: memref<8x8x128xf32, #tpu.memory_space<vmem>>, %arg9: memref<8x8x128xf32, #tpu.memory_space<vmem>>) attributes {dimension_semantics = [#tpu.dimension_semantics<parallel>], iteration_bounds = array<i64: 1>, scalar_prefetch = 0 : i64, scratch_operands = 2 : i64, tpu.core_type = #tpu.core_type<tc>, window_params = [{transform_indices = @transform_0, window_bounds = array<i64: 8, 8, 16>}, {pipeline_mode = #tpu.pipeline_mode<synchronous>, transform_indices = @transform_1, window_bounds = array<i64: 16, 256>}, {pipeline_mode = #tpu.pipeline_mode<synchronous>, transform_indices = @transform_2, window_bounds = array<i64: 1, 256>}, {pipeline_mode = #tpu.pipeline_mode<synchronous>, transform_indices = @transform_3, window_bounds = array<i64: 32, 128>}, {pipeline_mode = #tpu.pipeline_mode<synchronous>, transform_indices = @transform_4, window_bounds = array<i64: 32, 128>}, {transform_indices = @transform_5, window_bounds = array<i64: 8, 8, 32>}, {transform_indices = @transform_6, window_bounds = array<i64: 8, 8, 32>}]} {
    %c0 = arith.constant 0 : index
    %c0_0 = arith.constant 0 : index
    %c0_1 = arith.constant 0 : index
    %0 = vector.load %arg1[%c0, %c0_0, %c0_1] : memref<8x8x16xf32, #tpu.memory_space<vmem>>, vector<8x8x16xf32>
    %1 = vector.shape_cast %0 : vector<8x8x16xf32> to vector<64x16xf32>
    %c0_2 = arith.constant 0 : index
    %c0_3 = arith.constant 0 : index
    %2 = vector.load %arg2[%c0_2, %c0_3] : memref<16x256xf32, #tpu.memory_space<vmem>>, vector<16x256xf32>
    %cst = arith.constant dense<0.000000e+00> : vector<64x256xf32>
    %3 = tpu.matmul %1, %2, %cst {dimension_numbers = #tpu.dot_dimension_numbers<[1], [0], [0], [1], [0, 0, 1, 1], [], []>} : vector<64x16xf32>, vector<16x256xf32>, vector<64x256xf32> -> vector<64x256xf32>
    %c0_4 = arith.constant 0 : index
    %c0_5 = arith.constant 0 : index
    %4 = vector.load %arg3[%c0_4, %c0_5] : memref<1x256xf32, #tpu.memory_space<vmem>>, vector<1x256xf32>
    %5 = vector.broadcast %4 : vector<1x256xf32> to vector<64x256xf32>
    %6 = arith.addf %3, %5 : vector<64x256xf32>
    %7 = vector.extract_strided_slice %6 {offsets = [0, 0], sizes = [64, 128], strides = [1, 1]} : vector<64x256xf32> to vector<64x128xf32>
    %8 = vector.shape_cast %7 : vector<64x128xf32> to vector<8x8x128xf32>
    %c0_6 = arith.constant 0 : index
    %c0_7 = arith.constant 0 : index
    %c0_8 = arith.constant 0 : index
    %9 = vector.load %arg8[%c0_6, %c0_7, %c0_8] : memref<8x8x128xf32, #tpu.memory_space<vmem>>, vector<8x8x128xf32>
    tpu.vector_store %arg8[%c0_6, %c0_7, %c0_8], %8 {strides = array<i32>} : memref<8x8x128xf32, #tpu.memory_space<vmem>>, vector<8x8x128xf32>,
    %10 = vector.extract_strided_slice %6 {offsets = [0, 128], sizes = [64, 128], strides = [1, 1]} : vector<64x256xf32> to vector<64x128xf32>
    %11 = vector.shape_cast %10 : vector<64x128xf32> to vector<8x8x128xf32>
    %c0_9 = arith.constant 0 : index
    %c0_10 = arith.constant 0 : index
    %c0_11 = arith.constant 0 : index
    %12 = vector.load %arg9[%c0_9, %c0_10, %c0_11] : memref<8x8x128xf32, #tpu.memory_space<vmem>>, vector<8x8x128xf32>
    tpu.vector_store %arg9[%c0_9, %c0_10, %c0_11], %11 {strides = array<i32>} : memref<8x8x128xf32, #tpu.memory_space<vmem>>, vector<8x8x128xf32>,
    %c0_12 = arith.constant 0 : index
    %c0_13 = arith.constant 0 : index
    %13 = vector.load %arg4[%c0_12, %c0_13] : memref<32x128xf32, #tpu.memory_space<vmem>>, vector<32x128xf32>
    %c0_14 = arith.constant 0 : index
    %c0_15 = arith.constant 0 : index
    %14 = vector.load %arg5[%c0_14, %c0_15] : memref<32x128xf32, #tpu.memory_space<vmem>>, vector<32x128xf32>
    %cst_16 = arith.constant 0.000000e+00 : f32
    %15 = vector.broadcast %cst_16 : f32 to vector<8x32xf32>
    %c0_i32 = arith.constant 0 : i32
    %c7_i32 = arith.constant 7 : i32
    %16 = arith.subi %c7_i32, %c0_i32 : i32
    %17 = arith.index_cast %c0_i32 : i32 to index
    %c0_17 = arith.constant 0 : index
    %c0_18 = arith.constant 0 : index
    %18 = vector.load %arg8[%17, %c0_17, %c0_18] : memref<8x8x128xf32, #tpu.memory_space<vmem>>, vector<1x8x128xf32>
    %19 = vector.shape_cast %18 : vector<1x8x128xf32> to vector<8x128xf32>
    %cst_19 = arith.constant dense<0.000000e+00> : vector<8x128xf32>
    %20 = tpu.matmul %15, %13, %cst_19 {dimension_numbers = #tpu.dot_dimension_numbers<[1], [0], [0], [1], [0, 0, 1, 1], [], []>} : vector<8x32xf32>, vector<32x128xf32>, vector<8x128xf32> -> vector<8x128xf32>
    %21 = arith.addf %19, %20 : vector<8x128xf32>
    %22 = arith.index_cast %16 : i32 to index
    %c0_20 = arith.constant 0 : index
    %c0_21 = arith.constant 0 : index
    %23 = vector.load %arg9[%22, %c0_20, %c0_21] : memref<8x8x128xf32, #tpu.memory_space<vmem>>, vector<1x8x128xf32>
    %24 = vector.shape_cast %23 : vector<1x8x128xf32> to vector<8x128xf32>
    %cst_22 = arith.constant dense<0.000000e+00> : vector<8x128xf32>
    %25 = tpu.matmul %15, %14, %cst_22 {dimension_numbers = #tpu.dot_dimension_numbers<[1], [0], [0], [1], [0, 0, 1, 1], [], []>} : vector<8x32xf32>, vector<32x128xf32>, vector<8x128xf32> -> vector<8x128xf32>
    %26 = arith.addf %24, %25 : vector<8x128xf32>
    %27 = vector.extract_strided_slice %21 {offsets = [0, 0], sizes = [8, 32], strides = [1, 1]} : vector<8x128xf32> to vector<8x32xf32>
    %28 = arith.negf %27 : vector<8x32xf32>
    %29 = math.exp %28 : vector<8x32xf32>
    %cst_23 = arith.constant 1.000000e+00 : f32
    %30 = vector.broadcast %cst_23 : f32 to vector<8x32xf32>
    %31 = arith.addf %30, %29 : vector<8x32xf32>
    %32 = arith.divf %30, %31 : vector<8x32xf32>
    %33 = vector.extract_strided_slice %21 {offsets = [0, 32], sizes = [8, 32], strides = [1, 1]} : vector<8x128xf32> to vector<8x32xf32>
    %34 = arith.negf %33 : vector<8x32xf32>
    %35 = math.exp %34 : vector<8x32xf32>
    %cst_24 = arith.constant 1.000000e+00 : f32
    %36 = vector.broadcast %cst_24 : f32 to vector<8x32xf32>
    %37 = arith.addf %36, %35 : vector<8x32xf32>
    %38 = arith.divf %36, %37 : vector<8x32xf32>
    %39 = vector.extract_strided_slice %21 {offsets = [0, 64], sizes = [8, 32], strides = [1, 1]} : vector<8x128xf32> to vector<8x32xf32>
    %40 = math.tanh %39 : vector<8x32xf32>
    %41 = vector.extract_strided_slice %21 {offsets = [0, 96], sizes = [8, 32], strides = [1, 1]} : vector<8x128xf32> to vector<8x32xf32>
    %42 = arith.negf %41 : vector<8x32xf32>
    %43 = math.exp %42 : vector<8x32xf32>
    %cst_25 = arith.constant 1.000000e+00 : f32
    %44 = vector.broadcast %cst_25 : f32 to vector<8x32xf32>
    %45 = arith.addf %44, %43 : vector<8x32xf32>
    %46 = arith.divf %44, %45 : vector<8x32xf32>
    %47 = arith.mulf %38, %15 : vector<8x32xf32>
    %48 = arith.mulf %32, %40 : vector<8x32xf32>
    %49 = arith.addf %47, %48 : vector<8x32xf32>
    %50 = math.tanh %49 : vector<8x32xf32>
    %51 = arith.mulf %46, %50 : vector<8x32xf32>
    %52 = vector.extract_strided_slice %26 {offsets = [0, 0], sizes = [8, 32], strides = [1, 1]} : vector<8x128xf32> to vector<8x32xf32>
    %53 = arith.negf %52 : vector<8x32xf32>
    %54 = math.exp %53 : vector<8x32xf32>
    %cst_26 = arith.constant 1.000000e+00 : f32
    %55 = vector.broadcast %cst_26 : f32 to vector<8x32xf32>
    %56 = arith.addf %55, %54 : vector<8x32xf32>
    %57 = arith.divf %55, %56 : vector<8x32xf32>
    %58 = vector.extract_strided_slice %26 {offsets = [0, 32], sizes = [8, 32], strides = [1, 1]} : vector<8x128xf32> to vector<8x32xf32>
    %59 = arith.negf %58 : vector<8x32xf32>
    %60 = math.exp %59 : vector<8x32xf32>
    %cst_27 = arith.constant 1.000000e+00 : f32
    %61 = vector.broadcast %cst_27 : f32 to vector<8x32xf32>
    %62 = arith.addf %61, %60 : vector<8x32xf32>
    %63 = arith.divf %61, %62 : vector<8x32xf32>
    %64 = vector.extract_strided_slice %26 {offsets = [0, 64], sizes = [8, 32], strides = [1, 1]} : vector<8x128xf32> to vector<8x32xf32>
    %65 = math.tanh %64 : vector<8x32xf32>
    %66 = vector.extract_strided_slice %26 {offsets = [0, 96], sizes = [8, 32], strides = [1, 1]} : vector<8x128xf32> to vector<8x32xf32>
    %67 = arith.negf %66 : vector<8x32xf32>
    %68 = math.exp %67 : vector<8x32xf32>
    %cst_28 = arith.constant 1.000000e+00 : f32
    %69 = vector.broadcast %cst_28 : f32 to vector<8x32xf32>
    %70 = arith.addf %69, %68 : vector<8x32xf32>
    %71 = arith.divf %69, %70 : vector<8x32xf32>
    %72 = arith.mulf %63, %15 : vector<8x32xf32>
    %73 = arith.mulf %57, %65 : vector<8x32xf32>
    %74 = arith.addf %72, %73 : vector<8x32xf32>
    %75 = math.tanh %74 : vector<8x32xf32>
    %76 = arith.mulf %71, %75 : vector<8x32xf32>
    %77 = arith.index_cast %c0_i32 : i32 to index
    %c0_29 = arith.constant 0 : index
    %c0_30 = arith.constant 0 : index
    %78 = vector.load %arg6[%77, %c0_29, %c0_30] : memref<8x8x32xf32, #tpu.memory_space<vmem>>, vector<1x8x32xf32>
    %79 = vector.shape_cast %78 : vector<1x8x32xf32> to vector<8x32xf32>
    %80 = vector.shape_cast %51 : vector<8x32xf32> to vector<1x8x32xf32>
    tpu.vector_store %arg6[%77, %c0_29, %c0_30], %80 {strides = array<i32>} : memref<8x8x32xf32, #tpu.memory_space<vmem>>, vector<1x8x32xf32>,
    %81 = arith.index_cast %16 : i32 to index
    %c0_31 = arith.constant 0 : index
    %c0_32 = arith.constant 0 : index
    %82 = vector.load %arg7[%81, %c0_31, %c0_32] : memref<8x8x32xf32, #tpu.memory_space<vmem>>, vector<1x8x32xf32>
    %83 = vector.shape_cast %82 : vector<1x8x32xf32> to vector<8x32xf32>
    %84 = vector.shape_cast %76 : vector<8x32xf32> to vector<1x8x32xf32>
    tpu.vector_store %arg7[%81, %c0_31, %c0_32], %84 {strides = array<i32>} : memref<8x8x32xf32, #tpu.memory_space<vmem>>, vector<1x8x32xf32>,
    %c1_i32 = arith.constant 1 : i32
    %c7_i32_33 = arith.constant 7 : i32
    %85 = arith.subi %c7_i32_33, %c1_i32 : i32
    %86 = arith.index_cast %c1_i32 : i32 to index
    %c0_34 = arith.constant 0 : index
    %c0_35 = arith.constant 0 : index
    %87 = vector.load %arg8[%86, %c0_34, %c0_35] : memref<8x8x128xf32, #tpu.memory_space<vmem>>, vector<1x8x128xf32>
    %88 = vector.shape_cast %87 : vector<1x8x128xf32> to vector<8x128xf32>
    %cst_36 = arith.constant dense<0.000000e+00> : vector<8x128xf32>
    %89 = tpu.matmul %51, %13, %cst_36 {dimension_numbers = #tpu.dot_dimension_numbers<[1], [0], [0], [1], [0, 0, 1, 1], [], []>} : vector<8x32xf32>, vector<32x128xf32>, vector<8x128xf32> -> vector<8x128xf32>
    %90 = arith.addf %88, %89 : vector<8x128xf32>
    %91 = arith.index_cast %85 : i32 to index
    %c0_37 = arith.constant 0 : index
    %c0_38 = arith.constant 0 : index
    %92 = vector.load %arg9[%91, %c0_37, %c0_38] : memref<8x8x128xf32, #tpu.memory_space<vmem>>, vector<1x8x128xf32>
    %93 = vector.shape_cast %92 : vector<1x8x128xf32> to vector<8x128xf32>
    %cst_39 = arith.constant dense<0.000000e+00> : vector<8x128xf32>
    %94 = tpu.matmul %76, %14, %cst_39 {dimension_numbers = #tpu.dot_dimension_numbers<[1], [0], [0], [1], [0, 0, 1, 1], [], []>} : vector<8x32xf32>, vector<32x128xf32>, vector<8x128xf32> -> vector<8x128xf32>
    %95 = arith.addf %93, %94 : vector<8x128xf32>
    %96 = vector.extract_strided_slice %90 {offsets = [0, 0], sizes = [8, 32], strides = [1, 1]} : vector<8x128xf32> to vector<8x32xf32>
    %97 = arith.negf %96 : vector<8x32xf32>
    %98 = math.exp %97 : vector<8x32xf32>
    %cst_40 = arith.constant 1.000000e+00 : f32
    %99 = vector.broadcast %cst_40 : f32 to vector<8x32xf32>
    %100 = arith.addf %99, %98 : vector<8x32xf32>
    %101 = arith.divf %99, %100 : vector<8x32xf32>
    %102 = vector.extract_strided_slice %90 {offsets = [0, 32], sizes = [8, 32], strides = [1, 1]} : vector<8x128xf32> to vector<8x32xf32>
    %103 = arith.negf %102 : vector<8x32xf32>
    %104 = math.exp %103 : vector<8x32xf32>
    %cst_41 = arith.constant 1.000000e+00 : f32
    %105 = vector.broadcast %cst_41 : f32 to vector<8x32xf32>
    %106 = arith.addf %105, %104 : vector<8x32xf32>
    %107 = arith.divf %105, %106 : vector<8x32xf32>
    %108 = vector.extract_strided_slice %90 {offsets = [0, 64], sizes = [8, 32], strides = [1, 1]} : vector<8x128xf32> to vector<8x32xf32>
    %109 = math.tanh %108 : vector<8x32xf32>
    %110 = vector.extract_strided_slice %90 {offsets = [0, 96], sizes = [8, 32], strides = [1, 1]} : vector<8x128xf32> to vector<8x32xf32>
    %111 = arith.negf %110 : vector<8x32xf32>
    %112 = math.exp %111 : vector<8x32xf32>
    %cst_42 = arith.constant 1.000000e+00 : f32
    %113 = vector.broadcast %cst_42 : f32 to vector<8x32xf32>
    %114 = arith.addf %113, %112 : vector<8x32xf32>
    %115 = arith.divf %113, %114 : vector<8x32xf32>
    %116 = arith.mulf %107, %49 : vector<8x32xf32>
    %117 = arith.mulf %101, %109 : vector<8x32xf32>
    %118 = arith.addf %116, %117 : vector<8x32xf32>
    %119 = math.tanh %118 : vector<8x32xf32>
    %120 = arith.mulf %115, %119 : vector<8x32xf32>
    %121 = vector.extract_strided_slice %95 {offsets = [0, 0], sizes = [8, 32], strides = [1, 1]} : vector<8x128xf32> to vector<8x32xf32>
    %122 = arith.negf %121 : vector<8x32xf32>
    %123 = math.exp %122 : vector<8x32xf32>
    %cst_43 = arith.constant 1.000000e+00 : f32
    %124 = vector.broadcast %cst_43 : f32 to vector<8x32xf32>
    %125 = arith.addf %124, %123 : vector<8x32xf32>
    %126 = arith.divf %124, %125 : vector<8x32xf32>
    %127 = vector.extract_strided_slice %95 {offsets = [0, 32], sizes = [8, 32], strides = [1, 1]} : vector<8x128xf32> to vector<8x32xf32>
    %128 = arith.negf %127 : vector<8x32xf32>
    %129 = math.exp %128 : vector<8x32xf32>
    %cst_44 = arith.constant 1.000000e+00 : f32
    %130 = vector.broadcast %cst_44 : f32 to vector<8x32xf32>
    %131 = arith.addf %130, %129 : vector<8x32xf32>
    %132 = arith.divf %130, %131 : vector<8x32xf32>
    %133 = vector.extract_strided_slice %95 {offsets = [0, 64], sizes = [8, 32], strides = [1, 1]} : vector<8x128xf32> to vector<8x32xf32>
    %134 = math.tanh %133 : vector<8x32xf32>
    %135 = vector.extract_strided_slice %95 {offsets = [0, 96], sizes = [8, 32], strides = [1, 1]} : vector<8x128xf32> to vector<8x32xf32>
    %136 = arith.negf %135 : vector<8x32xf32>
    %137 = math.exp %136 : vector<8x32xf32>
    %cst_45 = arith.constant 1.000000e+00 : f32
    %138 = vector.broadcast %cst_45 : f32 to vector<8x32xf32>
    %139 = arith.addf %138, %137 : vector<8x32xf32>
    %140 = arith.divf %138, %139 : vector<8x32xf32>
    %141 = arith.mulf %132, %74 : vector<8x32xf32>
    %142 = arith.mulf %126, %134 : vector<8x32xf32>
    %143 = arith.addf %141, %142 : vector<8x32xf32>
    %144 = math.tanh %143 : vector<8x32xf32>
    %145 = arith.mulf %140, %144 : vector<8x32xf32>
    %146 = arith.index_cast %c1_i32 : i32 to index
    %c0_46 = arith.constant 0 : index
    %c0_47 = arith.constant 0 : index
    %147 = vector.load %arg6[%146, %c0_46, %c0_47] : memref<8x8x32xf32, #tpu.memory_space<vmem>>, vector<1x8x32xf32>
    %148 = vector.shape_cast %147 : vector<1x8x32xf32> to vector<8x32xf32>
    %149 = vector.shape_cast %120 : vector<8x32xf32> to vector<1x8x32xf32>
    tpu.vector_store %arg6[%146, %c0_46, %c0_47], %149 {strides = array<i32>} : memref<8x8x32xf32, #tpu.memory_space<vmem>>, vector<1x8x32xf32>,
    %150 = arith.index_cast %85 : i32 to index
    %c0_48 = arith.constant 0 : index
    %c0_49 = arith.constant 0 : index
    %151 = vector.load %arg7[%150, %c0_48, %c0_49] : memref<8x8x32xf32, #tpu.memory_space<vmem>>, vector<1x8x32xf32>
    %152 = vector.shape_cast %151 : vector<1x8x32xf32> to vector<8x32xf32>
    %153 = vector.shape_cast %145 : vector<8x32xf32> to vector<1x8x32xf32>
    tpu.vector_store %arg7[%150, %c0_48, %c0_49], %153 {strides = array<i32>} : memref<8x8x32xf32, #tpu.memory_space<vmem>>, vector<1x8x32xf32>,
    %c2_i32 = arith.constant 2 : i32
    %c7_i32_50 = arith.constant 7 : i32
    %154 = arith.subi %c7_i32_50, %c2_i32 : i32
    %155 = arith.index_cast %c2_i32 : i32 to index
    %c0_51 = arith.constant 0 : index
    %c0_52 = arith.constant 0 : index
    %156 = vector.load %arg8[%155, %c0_51, %c0_52] : memref<8x8x128xf32, #tpu.memory_space<vmem>>, vector<1x8x128xf32>
    %157 = vector.shape_cast %156 : vector<1x8x128xf32> to vector<8x128xf32>
    %cst_53 = arith.constant dense<0.000000e+00> : vector<8x128xf32>
    %158 = tpu.matmul %120, %13, %cst_53 {dimension_numbers = #tpu.dot_dimension_numbers<[1], [0], [0], [1], [0, 0, 1, 1], [], []>} : vector<8x32xf32>, vector<32x128xf32>, vector<8x128xf32> -> vector<8x128xf32>
    %159 = arith.addf %157, %158 : vector<8x128xf32>
    %160 = arith.index_cast %154 : i32 to index
    %c0_54 = arith.constant 0 : index
    %c0_55 = arith.constant 0 : index
    %161 = vector.load %arg9[%160, %c0_54, %c0_55] : memref<8x8x128xf32, #tpu.memory_space<vmem>>, vector<1x8x128xf32>
    %162 = vector.shape_cast %161 : vector<1x8x128xf32> to vector<8x128xf32>
    %cst_56 = arith.constant dense<0.000000e+00> : vector<8x128xf32>
    %163 = tpu.matmul %145, %14, %cst_56 {dimension_numbers = #tpu.dot_dimension_numbers<[1], [0], [0], [1], [0, 0, 1, 1], [], []>} : vector<8x32xf32>, vector<32x128xf32>, vector<8x128xf32> -> vector<8x128xf32>
    %164 = arith.addf %162, %163 : vector<8x128xf32>
    %165 = vector.extract_strided_slice %159 {offsets = [0, 0], sizes = [8, 32], strides = [1, 1]} : vector<8x128xf32> to vector<8x32xf32>
    %166 = arith.negf %165 : vector<8x32xf32>
    %167 = math.exp %166 : vector<8x32xf32>
    %cst_57 = arith.constant 1.000000e+00 : f32
    %168 = vector.broadcast %cst_57 : f32 to vector<8x32xf32>
    %169 = arith.addf %168, %167 : vector<8x32xf32>
    %170 = arith.divf %168, %169 : vector<8x32xf32>
    %171 = vector.extract_strided_slice %159 {offsets = [0, 32], sizes = [8, 32], strides = [1, 1]} : vector<8x128xf32> to vector<8x32xf32>
    %172 = arith.negf %171 : vector<8x32xf32>
    %173 = math.exp %172 : vector<8x32xf32>
    %cst_58 = arith.constant 1.000000e+00 : f32
    %174 = vector.broadcast %cst_58 : f32 to vector<8x32xf32>
    %175 = arith.addf %174, %173 : vector<8x32xf32>
    %176 = arith.divf %174, %175 : vector<8x32xf32>
    %177 = vector.extract_strided_slice %159 {offsets = [0, 64], sizes = [8, 32], strides = [1, 1]} : vector<8x128xf32> to vector<8x32xf32>
    %178 = math.tanh %177 : vector<8x32xf32>
    %179 = vector.extract_strided_slice %159 {offsets = [0, 96], sizes = [8, 32], strides = [1, 1]} : vector<8x128xf32> to vector<8x32xf32>
    %180 = arith.negf %179 : vector<8x32xf32>
    %181 = math.exp %180 : vector<8x32xf32>
    %cst_59 = arith.constant 1.000000e+00 : f32
    %182 = vector.broadcast %cst_59 : f32 to vector<8x32xf32>
    %183 = arith.addf %182, %181 : vector<8x32xf32>
    %184 = arith.divf %182, %183 : vector<8x32xf32>
    %185 = arith.mulf %176, %118 : vector<8x32xf32>
    %186 = arith.mulf %170, %178 : vector<8x32xf32>
    %187 = arith.addf %185, %186 : vector<8x32xf32>
    %188 = math.tanh %187 : vector<8x32xf32>
    %189 = arith.mulf %184, %188 : vector<8x32xf32>
    %190 = vector.extract_strided_slice %164 {offsets = [0, 0], sizes = [8, 32], strides = [1, 1]} : vector<8x128xf32> to vector<8x32xf32>
    %191 = arith.negf %190 : vector<8x32xf32>
    %192 = math.exp %191 : vector<8x32xf32>
    %cst_60 = arith.constant 1.000000e+00 : f32
    %193 = vector.broadcast %cst_60 : f32 to vector<8x32xf32>
    %194 = arith.addf %193, %192 : vector<8x32xf32>
    %195 = arith.divf %193, %194 : vector<8x32xf32>
    %196 = vector.extract_strided_slice %164 {offsets = [0, 32], sizes = [8, 32], strides = [1, 1]} : vector<8x128xf32> to vector<8x32xf32>
    %197 = arith.negf %196 : vector<8x32xf32>
    %198 = math.exp %197 : vector<8x32xf32>
    %cst_61 = arith.constant 1.000000e+00 : f32
    %199 = vector.broadcast %cst_61 : f32 to vector<8x32xf32>
    %200 = arith.addf %199, %198 : vector<8x32xf32>
    %201 = arith.divf %199, %200 : vector<8x32xf32>
    %202 = vector.extract_strided_slice %164 {offsets = [0, 64], sizes = [8, 32], strides = [1, 1]} : vector<8x128xf32> to vector<8x32xf32>
    %203 = math.tanh %202 : vector<8x32xf32>
    %204 = vector.extract_strided_slice %164 {offsets = [0, 96], sizes = [8, 32], strides = [1, 1]} : vector<8x128xf32> to vector<8x32xf32>
    %205 = arith.negf %204 : vector<8x32xf32>
    %206 = math.exp %205 : vector<8x32xf32>
    %cst_62 = arith.constant 1.000000e+00 : f32
    %207 = vector.broadcast %cst_62 : f32 to vector<8x32xf32>
    %208 = arith.addf %207, %206 : vector<8x32xf32>
    %209 = arith.divf %207, %208 : vector<8x32xf32>
    %210 = arith.mulf %201, %143 : vector<8x32xf32>
    %211 = arith.mulf %195, %203 : vector<8x32xf32>
    %212 = arith.addf %210, %211 : vector<8x32xf32>
    %213 = math.tanh %212 : vector<8x32xf32>
    %214 = arith.mulf %209, %213 : vector<8x32xf32>
    %215 = arith.index_cast %c2_i32 : i32 to index
    %c0_63 = arith.constant 0 : index
    %c0_64 = arith.constant 0 : index
    %216 = vector.load %arg6[%215, %c0_63, %c0_64] : memref<8x8x32xf32, #tpu.memory_space<vmem>>, vector<1x8x32xf32>
    %217 = vector.shape_cast %216 : vector<1x8x32xf32> to vector<8x32xf32>
    %218 = vector.shape_cast %189 : vector<8x32xf32> to vector<1x8x32xf32>
    tpu.vector_store %arg6[%215, %c0_63, %c0_64], %218 {strides = array<i32>} : memref<8x8x32xf32, #tpu.memory_space<vmem>>, vector<1x8x32xf32>,
    %219 = arith.index_cast %154 : i32 to index
    %c0_65 = arith.constant 0 : index
    %c0_66 = arith.constant 0 : index
    %220 = vector.load %arg7[%219, %c0_65, %c0_66] : memref<8x8x32xf32, #tpu.memory_space<vmem>>, vector<1x8x32xf32>
    %221 = vector.shape_cast %220 : vector<1x8x32xf32> to vector<8x32xf32>
    %222 = vector.shape_cast %214 : vector<8x32xf32> to vector<1x8x32xf32>
    tpu.vector_store %arg7[%219, %c0_65, %c0_66], %222 {strides = array<i32>} : memref<8x8x32xf32, #tpu.memory_space<vmem>>, vector<1x8x32xf32>,
    %c3_i32 = arith.constant 3 : i32
    %c7_i32_67 = arith.constant 7 : i32
    %223 = arith.subi %c7_i32_67, %c3_i32 : i32
    %224 = arith.index_cast %c3_i32 : i32 to index
    %c0_68 = arith.constant 0 : index
    %c0_69 = arith.constant 0 : index
    %225 = vector.load %arg8[%224, %c0_68, %c0_69] : memref<8x8x128xf32, #tpu.memory_space<vmem>>, vector<1x8x128xf32>
    %226 = vector.shape_cast %225 : vector<1x8x128xf32> to vector<8x128xf32>
    %cst_70 = arith.constant dense<0.000000e+00> : vector<8x128xf32>
    %227 = tpu.matmul %189, %13, %cst_70 {dimension_numbers = #tpu.dot_dimension_numbers<[1], [0], [0], [1], [0, 0, 1, 1], [], []>} : vector<8x32xf32>, vector<32x128xf32>, vector<8x128xf32> -> vector<8x128xf32>
    %228 = arith.addf %226, %227 : vector<8x128xf32>
    %229 = arith.index_cast %223 : i32 to index
    %c0_71 = arith.constant 0 : index
    %c0_72 = arith.constant 0 : index
    %230 = vector.load %arg9[%229, %c0_71, %c0_72] : memref<8x8x128xf32, #tpu.memory_space<vmem>>, vector<1x8x128xf32>
    %231 = vector.shape_cast %230 : vector<1x8x128xf32> to vector<8x128xf32>
    %cst_73 = arith.constant dense<0.000000e+00> : vector<8x128xf32>
    %232 = tpu.matmul %214, %14, %cst_73 {dimension_numbers = #tpu.dot_dimension_numbers<[1], [0], [0], [1], [0, 0, 1, 1], [], []>} : vector<8x32xf32>, vector<32x128xf32>, vector<8x128xf32> -> vector<8x128xf32>
    %233 = arith.addf %231, %232 : vector<8x128xf32>
    %234 = vector.extract_strided_slice %228 {offsets = [0, 0], sizes = [8, 32], strides = [1, 1]} : vector<8x128xf32> to vector<8x32xf32>
    %235 = arith.negf %234 : vector<8x32xf32>
    %236 = math.exp %235 : vector<8x32xf32>
    %cst_74 = arith.constant 1.000000e+00 : f32
    %237 = vector.broadcast %cst_74 : f32 to vector<8x32xf32>
    %238 = arith.addf %237, %236 : vector<8x32xf32>
    %239 = arith.divf %237, %238 : vector<8x32xf32>
    %240 = vector.extract_strided_slice %228 {offsets = [0, 32], sizes = [8, 32], strides = [1, 1]} : vector<8x128xf32> to vector<8x32xf32>
    %241 = arith.negf %240 : vector<8x32xf32>
    %242 = math.exp %241 : vector<8x32xf32>
    %cst_75 = arith.constant 1.000000e+00 : f32
    %243 = vector.broadcast %cst_75 : f32 to vector<8x32xf32>
    %244 = arith.addf %243, %242 : vector<8x32xf32>
    %245 = arith.divf %243, %244 : vector<8x32xf32>
    %246 = vector.extract_strided_slice %228 {offsets = [0, 64], sizes = [8, 32], strides = [1, 1]} : vector<8x128xf32> to vector<8x32xf32>
    %247 = math.tanh %246 : vector<8x32xf32>
    %248 = vector.extract_strided_slice %228 {offsets = [0, 96], sizes = [8, 32], strides = [1, 1]} : vector<8x128xf32> to vector<8x32xf32>
    %249 = arith.negf %248 : vector<8x32xf32>
    %250 = math.exp %249 : vector<8x32xf32>
    %cst_76 = arith.constant 1.000000e+00 : f32
    %251 = vector.broadcast %cst_76 : f32 to vector<8x32xf32>
    %252 = arith.addf %251, %250 : vector<8x32xf32>
    %253 = arith.divf %251, %252 : vector<8x32xf32>
    %254 = arith.mulf %245, %187 : vector<8x32xf32>
    %255 = arith.mulf %239, %247 : vector<8x32xf32>
    %256 = arith.addf %254, %255 : vector<8x32xf32>
    %257 = math.tanh %256 : vector<8x32xf32>
    %258 = arith.mulf %253, %257 : vector<8x32xf32>
    %259 = vector.extract_strided_slice %233 {offsets = [0, 0], sizes = [8, 32], strides = [1, 1]} : vector<8x128xf32> to vector<8x32xf32>
    %260 = arith.negf %259 : vector<8x32xf32>
    %261 = math.exp %260 : vector<8x32xf32>
    %cst_77 = arith.constant 1.000000e+00 : f32
    %262 = vector.broadcast %cst_77 : f32 to vector<8x32xf32>
    %263 = arith.addf %262, %261 : vector<8x32xf32>
    %264 = arith.divf %262, %263 : vector<8x32xf32>
    %265 = vector.extract_strided_slice %233 {offsets = [0, 32], sizes = [8, 32], strides = [1, 1]} : vector<8x128xf32> to vector<8x32xf32>
    %266 = arith.negf %265 : vector<8x32xf32>
    %267 = math.exp %266 : vector<8x32xf32>
    %cst_78 = arith.constant 1.000000e+00 : f32
    %268 = vector.broadcast %cst_78 : f32 to vector<8x32xf32>
    %269 = arith.addf %268, %267 : vector<8x32xf32>
    %270 = arith.divf %268, %269 : vector<8x32xf32>
    %271 = vector.extract_strided_slice %233 {offsets = [0, 64], sizes = [8, 32], strides = [1, 1]} : vector<8x128xf32> to vector<8x32xf32>
    %272 = math.tanh %271 : vector<8x32xf32>
    %273 = vector.extract_strided_slice %233 {offsets = [0, 96], sizes = [8, 32], strides = [1, 1]} : vector<8x128xf32> to vector<8x32xf32>
    %274 = arith.negf %273 : vector<8x32xf32>
    %275 = math.exp %274 : vector<8x32xf32>
    %cst_79 = arith.constant 1.000000e+00 : f32
    %276 = vector.broadcast %cst_79 : f32 to vector<8x32xf32>
    %277 = arith.addf %276, %275 : vector<8x32xf32>
    %278 = arith.divf %276, %277 : vector<8x32xf32>
    %279 = arith.mulf %270, %212 : vector<8x32xf32>
    %280 = arith.mulf %264, %272 : vector<8x32xf32>
    %281 = arith.addf %279, %280 : vector<8x32xf32>
    %282 = math.tanh %281 : vector<8x32xf32>
    %283 = arith.mulf %278, %282 : vector<8x32xf32>
    %284 = arith.index_cast %c3_i32 : i32 to index
    %c0_80 = arith.constant 0 : index
    %c0_81 = arith.constant 0 : index
    %285 = vector.load %arg6[%284, %c0_80, %c0_81] : memref<8x8x32xf32, #tpu.memory_space<vmem>>, vector<1x8x32xf32>
    %286 = vector.shape_cast %285 : vector<1x8x32xf32> to vector<8x32xf32>
    %287 = vector.shape_cast %258 : vector<8x32xf32> to vector<1x8x32xf32>
    tpu.vector_store %arg6[%284, %c0_80, %c0_81], %287 {strides = array<i32>} : memref<8x8x32xf32, #tpu.memory_space<vmem>>, vector<1x8x32xf32>,
    %288 = arith.index_cast %223 : i32 to index
    %c0_82 = arith.constant 0 : index
    %c0_83 = arith.constant 0 : index
    %289 = vector.load %arg7[%288, %c0_82, %c0_83] : memref<8x8x32xf32, #tpu.memory_space<vmem>>, vector<1x8x32xf32>
    %290 = vector.shape_cast %289 : vector<1x8x32xf32> to vector<8x32xf32>
    %291 = vector.shape_cast %283 : vector<8x32xf32> to vector<1x8x32xf32>
    tpu.vector_store %arg7[%288, %c0_82, %c0_83], %291 {strides = array<i32>} : memref<8x8x32xf32, #tpu.memory_space<vmem>>, vector<1x8x32xf32>,
    %c4_i32 = arith.constant 4 : i32
    %c7_i32_84 = arith.constant 7 : i32
    %292 = arith.subi %c7_i32_84, %c4_i32 : i32
    %293 = arith.index_cast %c4_i32 : i32 to index
    %c0_85 = arith.constant 0 : index
    %c0_86 = arith.constant 0 : index
    %294 = vector.load %arg8[%293, %c0_85, %c0_86] : memref<8x8x128xf32, #tpu.memory_space<vmem>>, vector<1x8x128xf32>
    %295 = vector.shape_cast %294 : vector<1x8x128xf32> to vector<8x128xf32>
    %cst_87 = arith.constant dense<0.000000e+00> : vector<8x128xf32>
    %296 = tpu.matmul %258, %13, %cst_87 {dimension_numbers = #tpu.dot_dimension_numbers<[1], [0], [0], [1], [0, 0, 1, 1], [], []>} : vector<8x32xf32>, vector<32x128xf32>, vector<8x128xf32> -> vector<8x128xf32>
    %297 = arith.addf %295, %296 : vector<8x128xf32>
    %298 = arith.index_cast %292 : i32 to index
    %c0_88 = arith.constant 0 : index
    %c0_89 = arith.constant 0 : index
    %299 = vector.load %arg9[%298, %c0_88, %c0_89] : memref<8x8x128xf32, #tpu.memory_space<vmem>>, vector<1x8x128xf32>
    %300 = vector.shape_cast %299 : vector<1x8x128xf32> to vector<8x128xf32>
    %cst_90 = arith.constant dense<0.000000e+00> : vector<8x128xf32>
    %301 = tpu.matmul %283, %14, %cst_90 {dimension_numbers = #tpu.dot_dimension_numbers<[1], [0], [0], [1], [0, 0, 1, 1], [], []>} : vector<8x32xf32>, vector<32x128xf32>, vector<8x128xf32> -> vector<8x128xf32>
    %302 = arith.addf %300, %301 : vector<8x128xf32>
    %303 = vector.extract_strided_slice %297 {offsets = [0, 0], sizes = [8, 32], strides = [1, 1]} : vector<8x128xf32> to vector<8x32xf32>
    %304 = arith.negf %303 : vector<8x32xf32>
    %305 = math.exp %304 : vector<8x32xf32>
    %cst_91 = arith.constant 1.000000e+00 : f32
    %306 = vector.broadcast %cst_91 : f32 to vector<8x32xf32>
    %307 = arith.addf %306, %305 : vector<8x32xf32>
    %308 = arith.divf %306, %307 : vector<8x32xf32>
    %309 = vector.extract_strided_slice %297 {offsets = [0, 32], sizes = [8, 32], strides = [1, 1]} : vector<8x128xf32> to vector<8x32xf32>
    %310 = arith.negf %309 : vector<8x32xf32>
    %311 = math.exp %310 : vector<8x32xf32>
    %cst_92 = arith.constant 1.000000e+00 : f32
    %312 = vector.broadcast %cst_92 : f32 to vector<8x32xf32>
    %313 = arith.addf %312, %311 : vector<8x32xf32>
    %314 = arith.divf %312, %313 : vector<8x32xf32>
    %315 = vector.extract_strided_slice %297 {offsets = [0, 64], sizes = [8, 32], strides = [1, 1]} : vector<8x128xf32> to vector<8x32xf32>
    %316 = math.tanh %315 : vector<8x32xf32>
    %317 = vector.extract_strided_slice %297 {offsets = [0, 96], sizes = [8, 32], strides = [1, 1]} : vector<8x128xf32> to vector<8x32xf32>
    %318 = arith.negf %317 : vector<8x32xf32>
    %319 = math.exp %318 : vector<8x32xf32>
    %cst_93 = arith.constant 1.000000e+00 : f32
    %320 = vector.broadcast %cst_93 : f32 to vector<8x32xf32>
    %321 = arith.addf %320, %319 : vector<8x32xf32>
    %322 = arith.divf %320, %321 : vector<8x32xf32>
    %323 = arith.mulf %314, %256 : vector<8x32xf32>
    %324 = arith.mulf %308, %316 : vector<8x32xf32>
    %325 = arith.addf %323, %324 : vector<8x32xf32>
    %326 = math.tanh %325 : vector<8x32xf32>
    %327 = arith.mulf %322, %326 : vector<8x32xf32>
    %328 = vector.extract_strided_slice %302 {offsets = [0, 0], sizes = [8, 32], strides = [1, 1]} : vector<8x128xf32> to vector<8x32xf32>
    %329 = arith.negf %328 : vector<8x32xf32>
    %330 = math.exp %329 : vector<8x32xf32>
    %cst_94 = arith.constant 1.000000e+00 : f32
    %331 = vector.broadcast %cst_94 : f32 to vector<8x32xf32>
    %332 = arith.addf %331, %330 : vector<8x32xf32>
    %333 = arith.divf %331, %332 : vector<8x32xf32>
    %334 = vector.extract_strided_slice %302 {offsets = [0, 32], sizes = [8, 32], strides = [1, 1]} : vector<8x128xf32> to vector<8x32xf32>
    %335 = arith.negf %334 : vector<8x32xf32>
    %336 = math.exp %335 : vector<8x32xf32>
    %cst_95 = arith.constant 1.000000e+00 : f32
    %337 = vector.broadcast %cst_95 : f32 to vector<8x32xf32>
    %338 = arith.addf %337, %336 : vector<8x32xf32>
    %339 = arith.divf %337, %338 : vector<8x32xf32>
    %340 = vector.extract_strided_slice %302 {offsets = [0, 64], sizes = [8, 32], strides = [1, 1]} : vector<8x128xf32> to vector<8x32xf32>
    %341 = math.tanh %340 : vector<8x32xf32>
    %342 = vector.extract_strided_slice %302 {offsets = [0, 96], sizes = [8, 32], strides = [1, 1]} : vector<8x128xf32> to vector<8x32xf32>
    %343 = arith.negf %342 : vector<8x32xf32>
    %344 = math.exp %343 : vector<8x32xf32>
    %cst_96 = arith.constant 1.000000e+00 : f32
    %345 = vector.broadcast %cst_96 : f32 to vector<8x32xf32>
    %346 = arith.addf %345, %344 : vector<8x32xf32>
    %347 = arith.divf %345, %346 : vector<8x32xf32>
    %348 = arith.mulf %339, %281 : vector<8x32xf32>
    %349 = arith.mulf %333, %341 : vector<8x32xf32>
    %350 = arith.addf %348, %349 : vector<8x32xf32>
    %351 = math.tanh %350 : vector<8x32xf32>
    %352 = arith.mulf %347, %351 : vector<8x32xf32>
    %353 = arith.index_cast %c4_i32 : i32 to index
    %c0_97 = arith.constant 0 : index
    %c0_98 = arith.constant 0 : index
    %354 = vector.load %arg6[%353, %c0_97, %c0_98] : memref<8x8x32xf32, #tpu.memory_space<vmem>>, vector<1x8x32xf32>
    %355 = vector.shape_cast %354 : vector<1x8x32xf32> to vector<8x32xf32>
    %356 = vector.shape_cast %327 : vector<8x32xf32> to vector<1x8x32xf32>
    tpu.vector_store %arg6[%353, %c0_97, %c0_98], %356 {strides = array<i32>} : memref<8x8x32xf32, #tpu.memory_space<vmem>>, vector<1x8x32xf32>,
    %357 = arith.index_cast %292 : i32 to index
    %c0_99 = arith.constant 0 : index
    %c0_100 = arith.constant 0 : index
    %358 = vector.load %arg7[%357, %c0_99, %c0_100] : memref<8x8x32xf32, #tpu.memory_space<vmem>>, vector<1x8x32xf32>
    %359 = vector.shape_cast %358 : vector<1x8x32xf32> to vector<8x32xf32>
    %360 = vector.shape_cast %352 : vector<8x32xf32> to vector<1x8x32xf32>
    tpu.vector_store %arg7[%357, %c0_99, %c0_100], %360 {strides = array<i32>} : memref<8x8x32xf32, #tpu.memory_space<vmem>>, vector<1x8x32xf32>,
    %c5_i32 = arith.constant 5 : i32
    %c7_i32_101 = arith.constant 7 : i32
    %361 = arith.subi %c7_i32_101, %c5_i32 : i32
    %362 = arith.index_cast %c5_i32 : i32 to index
    %c0_102 = arith.constant 0 : index
    %c0_103 = arith.constant 0 : index
    %363 = vector.load %arg8[%362, %c0_102, %c0_103] : memref<8x8x128xf32, #tpu.memory_space<vmem>>, vector<1x8x128xf32>
    %364 = vector.shape_cast %363 : vector<1x8x128xf32> to vector<8x128xf32>
    %cst_104 = arith.constant dense<0.000000e+00> : vector<8x128xf32>
    %365 = tpu.matmul %327, %13, %cst_104 {dimension_numbers = #tpu.dot_dimension_numbers<[1], [0], [0], [1], [0, 0, 1, 1], [], []>} : vector<8x32xf32>, vector<32x128xf32>, vector<8x128xf32> -> vector<8x128xf32>
    %366 = arith.addf %364, %365 : vector<8x128xf32>
    %367 = arith.index_cast %361 : i32 to index
    %c0_105 = arith.constant 0 : index
    %c0_106 = arith.constant 0 : index
    %368 = vector.load %arg9[%367, %c0_105, %c0_106] : memref<8x8x128xf32, #tpu.memory_space<vmem>>, vector<1x8x128xf32>
    %369 = vector.shape_cast %368 : vector<1x8x128xf32> to vector<8x128xf32>
    %cst_107 = arith.constant dense<0.000000e+00> : vector<8x128xf32>
    %370 = tpu.matmul %352, %14, %cst_107 {dimension_numbers = #tpu.dot_dimension_numbers<[1], [0], [0], [1], [0, 0, 1, 1], [], []>} : vector<8x32xf32>, vector<32x128xf32>, vector<8x128xf32> -> vector<8x128xf32>
    %371 = arith.addf %369, %370 : vector<8x128xf32>
    %372 = vector.extract_strided_slice %366 {offsets = [0, 0], sizes = [8, 32], strides = [1, 1]} : vector<8x128xf32> to vector<8x32xf32>
    %373 = arith.negf %372 : vector<8x32xf32>
    %374 = math.exp %373 : vector<8x32xf32>
    %cst_108 = arith.constant 1.000000e+00 : f32
    %375 = vector.broadcast %cst_108 : f32 to vector<8x32xf32>
    %376 = arith.addf %375, %374 : vector<8x32xf32>
    %377 = arith.divf %375, %376 : vector<8x32xf32>
    %378 = vector.extract_strided_slice %366 {offsets = [0, 32], sizes = [8, 32], strides = [1, 1]} : vector<8x128xf32> to vector<8x32xf32>
    %379 = arith.negf %378 : vector<8x32xf32>
    %380 = math.exp %379 : vector<8x32xf32>
    %cst_109 = arith.constant 1.000000e+00 : f32
    %381 = vector.broadcast %cst_109 : f32 to vector<8x32xf32>
    %382 = arith.addf %381, %380 : vector<8x32xf32>
    %383 = arith.divf %381, %382 : vector<8x32xf32>
    %384 = vector.extract_strided_slice %366 {offsets = [0, 64], sizes = [8, 32], strides = [1, 1]} : vector<8x128xf32> to vector<8x32xf32>
    %385 = math.tanh %384 : vector<8x32xf32>
    %386 = vector.extract_strided_slice %366 {offsets = [0, 96], sizes = [8, 32], strides = [1, 1]} : vector<8x128xf32> to vector<8x32xf32>
    %387 = arith.negf %386 : vector<8x32xf32>
    %388 = math.exp %387 : vector<8x32xf32>
    %cst_110 = arith.constant 1.000000e+00 : f32
    %389 = vector.broadcast %cst_110 : f32 to vector<8x32xf32>
    %390 = arith.addf %389, %388 : vector<8x32xf32>
    %391 = arith.divf %389, %390 : vector<8x32xf32>
    %392 = arith.mulf %383, %325 : vector<8x32xf32>
    %393 = arith.mulf %377, %385 : vector<8x32xf32>
    %394 = arith.addf %392, %393 : vector<8x32xf32>
    %395 = math.tanh %394 : vector<8x32xf32>
    %396 = arith.mulf %391, %395 : vector<8x32xf32>
    %397 = vector.extract_strided_slice %371 {offsets = [0, 0], sizes = [8, 32], strides = [1, 1]} : vector<8x128xf32> to vector<8x32xf32>
    %398 = arith.negf %397 : vector<8x32xf32>
    %399 = math.exp %398 : vector<8x32xf32>
    %cst_111 = arith.constant 1.000000e+00 : f32
    %400 = vector.broadcast %cst_111 : f32 to vector<8x32xf32>
    %401 = arith.addf %400, %399 : vector<8x32xf32>
    %402 = arith.divf %400, %401 : vector<8x32xf32>
    %403 = vector.extract_strided_slice %371 {offsets = [0, 32], sizes = [8, 32], strides = [1, 1]} : vector<8x128xf32> to vector<8x32xf32>
    %404 = arith.negf %403 : vector<8x32xf32>
    %405 = math.exp %404 : vector<8x32xf32>
    %cst_112 = arith.constant 1.000000e+00 : f32
    %406 = vector.broadcast %cst_112 : f32 to vector<8x32xf32>
    %407 = arith.addf %406, %405 : vector<8x32xf32>
    %408 = arith.divf %406, %407 : vector<8x32xf32>
    %409 = vector.extract_strided_slice %371 {offsets = [0, 64], sizes = [8, 32], strides = [1, 1]} : vector<8x128xf32> to vector<8x32xf32>
    %410 = math.tanh %409 : vector<8x32xf32>
    %411 = vector.extract_strided_slice %371 {offsets = [0, 96], sizes = [8, 32], strides = [1, 1]} : vector<8x128xf32> to vector<8x32xf32>
    %412 = arith.negf %411 : vector<8x32xf32>
    %413 = math.exp %412 : vector<8x32xf32>
    %cst_113 = arith.constant 1.000000e+00 : f32
    %414 = vector.broadcast %cst_113 : f32 to vector<8x32xf32>
    %415 = arith.addf %414, %413 : vector<8x32xf32>
    %416 = arith.divf %414, %415 : vector<8x32xf32>
    %417 = arith.mulf %408, %350 : vector<8x32xf32>
    %418 = arith.mulf %402, %410 : vector<8x32xf32>
    %419 = arith.addf %417, %418 : vector<8x32xf32>
    %420 = math.tanh %419 : vector<8x32xf32>
    %421 = arith.mulf %416, %420 : vector<8x32xf32>
    %422 = arith.index_cast %c5_i32 : i32 to index
    %c0_114 = arith.constant 0 : index
    %c0_115 = arith.constant 0 : index
    %423 = vector.load %arg6[%422, %c0_114, %c0_115] : memref<8x8x32xf32, #tpu.memory_space<vmem>>, vector<1x8x32xf32>
    %424 = vector.shape_cast %423 : vector<1x8x32xf32> to vector<8x32xf32>
    %425 = vector.shape_cast %396 : vector<8x32xf32> to vector<1x8x32xf32>
    tpu.vector_store %arg6[%422, %c0_114, %c0_115], %425 {strides = array<i32>} : memref<8x8x32xf32, #tpu.memory_space<vmem>>, vector<1x8x32xf32>,
    %426 = arith.index_cast %361 : i32 to index
    %c0_116 = arith.constant 0 : index
    %c0_117 = arith.constant 0 : index
    %427 = vector.load %arg7[%426, %c0_116, %c0_117] : memref<8x8x32xf32, #tpu.memory_space<vmem>>, vector<1x8x32xf32>
    %428 = vector.shape_cast %427 : vector<1x8x32xf32> to vector<8x32xf32>
    %429 = vector.shape_cast %421 : vector<8x32xf32> to vector<1x8x32xf32>
    tpu.vector_store %arg7[%426, %c0_116, %c0_117], %429 {strides = array<i32>} : memref<8x8x32xf32, #tpu.memory_space<vmem>>, vector<1x8x32xf32>,
    %c6_i32 = arith.constant 6 : i32
    %c7_i32_118 = arith.constant 7 : i32
    %430 = arith.subi %c7_i32_118, %c6_i32 : i32
    %431 = arith.index_cast %c6_i32 : i32 to index
    %c0_119 = arith.constant 0 : index
    %c0_120 = arith.constant 0 : index
    %432 = vector.load %arg8[%431, %c0_119, %c0_120] : memref<8x8x128xf32, #tpu.memory_space<vmem>>, vector<1x8x128xf32>
    %433 = vector.shape_cast %432 : vector<1x8x128xf32> to vector<8x128xf32>
    %cst_121 = arith.constant dense<0.000000e+00> : vector<8x128xf32>
    %434 = tpu.matmul %396, %13, %cst_121 {dimension_numbers = #tpu.dot_dimension_numbers<[1], [0], [0], [1], [0, 0, 1, 1], [], []>} : vector<8x32xf32>, vector<32x128xf32>, vector<8x128xf32> -> vector<8x128xf32>
    %435 = arith.addf %433, %434 : vector<8x128xf32>
    %436 = arith.index_cast %430 : i32 to index
    %c0_122 = arith.constant 0 : index
    %c0_123 = arith.constant 0 : index
    %437 = vector.load %arg9[%436, %c0_122, %c0_123] : memref<8x8x128xf32, #tpu.memory_space<vmem>>, vector<1x8x128xf32>
    %438 = vector.shape_cast %437 : vector<1x8x128xf32> to vector<8x128xf32>
    %cst_124 = arith.constant dense<0.000000e+00> : vector<8x128xf32>
    %439 = tpu.matmul %421, %14, %cst_124 {dimension_numbers = #tpu.dot_dimension_numbers<[1], [0], [0], [1], [0, 0, 1, 1], [], []>} : vector<8x32xf32>, vector<32x128xf32>, vector<8x128xf32> -> vector<8x128xf32>
    %440 = arith.addf %438, %439 : vector<8x128xf32>
    %441 = vector.extract_strided_slice %435 {offsets = [0, 0], sizes = [8, 32], strides = [1, 1]} : vector<8x128xf32> to vector<8x32xf32>
    %442 = arith.negf %441 : vector<8x32xf32>
    %443 = math.exp %442 : vector<8x32xf32>
    %cst_125 = arith.constant 1.000000e+00 : f32
    %444 = vector.broadcast %cst_125 : f32 to vector<8x32xf32>
    %445 = arith.addf %444, %443 : vector<8x32xf32>
    %446 = arith.divf %444, %445 : vector<8x32xf32>
    %447 = vector.extract_strided_slice %435 {offsets = [0, 32], sizes = [8, 32], strides = [1, 1]} : vector<8x128xf32> to vector<8x32xf32>
    %448 = arith.negf %447 : vector<8x32xf32>
    %449 = math.exp %448 : vector<8x32xf32>
    %cst_126 = arith.constant 1.000000e+00 : f32
    %450 = vector.broadcast %cst_126 : f32 to vector<8x32xf32>
    %451 = arith.addf %450, %449 : vector<8x32xf32>
    %452 = arith.divf %450, %451 : vector<8x32xf32>
    %453 = vector.extract_strided_slice %435 {offsets = [0, 64], sizes = [8, 32], strides = [1, 1]} : vector<8x128xf32> to vector<8x32xf32>
    %454 = math.tanh %453 : vector<8x32xf32>
    %455 = vector.extract_strided_slice %435 {offsets = [0, 96], sizes = [8, 32], strides = [1, 1]} : vector<8x128xf32> to vector<8x32xf32>
    %456 = arith.negf %455 : vector<8x32xf32>
    %457 = math.exp %456 : vector<8x32xf32>
    %cst_127 = arith.constant 1.000000e+00 : f32
    %458 = vector.broadcast %cst_127 : f32 to vector<8x32xf32>
    %459 = arith.addf %458, %457 : vector<8x32xf32>
    %460 = arith.divf %458, %459 : vector<8x32xf32>
    %461 = arith.mulf %452, %394 : vector<8x32xf32>
    %462 = arith.mulf %446, %454 : vector<8x32xf32>
    %463 = arith.addf %461, %462 : vector<8x32xf32>
    %464 = math.tanh %463 : vector<8x32xf32>
    %465 = arith.mulf %460, %464 : vector<8x32xf32>
    %466 = vector.extract_strided_slice %440 {offsets = [0, 0], sizes = [8, 32], strides = [1, 1]} : vector<8x128xf32> to vector<8x32xf32>
    %467 = arith.negf %466 : vector<8x32xf32>
    %468 = math.exp %467 : vector<8x32xf32>
    %cst_128 = arith.constant 1.000000e+00 : f32
    %469 = vector.broadcast %cst_128 : f32 to vector<8x32xf32>
    %470 = arith.addf %469, %468 : vector<8x32xf32>
    %471 = arith.divf %469, %470 : vector<8x32xf32>
    %472 = vector.extract_strided_slice %440 {offsets = [0, 32], sizes = [8, 32], strides = [1, 1]} : vector<8x128xf32> to vector<8x32xf32>
    %473 = arith.negf %472 : vector<8x32xf32>
    %474 = math.exp %473 : vector<8x32xf32>
    %cst_129 = arith.constant 1.000000e+00 : f32
    %475 = vector.broadcast %cst_129 : f32 to vector<8x32xf32>
    %476 = arith.addf %475, %474 : vector<8x32xf32>
    %477 = arith.divf %475, %476 : vector<8x32xf32>
    %478 = vector.extract_strided_slice %440 {offsets = [0, 64], sizes = [8, 32], strides = [1, 1]} : vector<8x128xf32> to vector<8x32xf32>
    %479 = math.tanh %478 : vector<8x32xf32>
    %480 = vector.extract_strided_slice %440 {offsets = [0, 96], sizes = [8, 32], strides = [1, 1]} : vector<8x128xf32> to vector<8x32xf32>
    %481 = arith.negf %480 : vector<8x32xf32>
    %482 = math.exp %481 : vector<8x32xf32>
    %cst_130 = arith.constant 1.000000e+00 : f32
    %483 = vector.broadcast %cst_130 : f32 to vector<8x32xf32>
    %484 = arith.addf %483, %482 : vector<8x32xf32>
    %485 = arith.divf %483, %484 : vector<8x32xf32>
    %486 = arith.mulf %477, %419 : vector<8x32xf32>
    %487 = arith.mulf %471, %479 : vector<8x32xf32>
    %488 = arith.addf %486, %487 : vector<8x32xf32>
    %489 = math.tanh %488 : vector<8x32xf32>
    %490 = arith.mulf %485, %489 : vector<8x32xf32>
    %491 = arith.index_cast %c6_i32 : i32 to index
    %c0_131 = arith.constant 0 : index
    %c0_132 = arith.constant 0 : index
    %492 = vector.load %arg6[%491, %c0_131, %c0_132] : memref<8x8x32xf32, #tpu.memory_space<vmem>>, vector<1x8x32xf32>
    %493 = vector.shape_cast %492 : vector<1x8x32xf32> to vector<8x32xf32>
    %494 = vector.shape_cast %465 : vector<8x32xf32> to vector<1x8x32xf32>
    tpu.vector_store %arg6[%491, %c0_131, %c0_132], %494 {strides = array<i32>} : memref<8x8x32xf32, #tpu.memory_space<vmem>>, vector<1x8x32xf32>,
    %495 = arith.index_cast %430 : i32 to index
    %c0_133 = arith.constant 0 : index
    %c0_134 = arith.constant 0 : index
    %496 = vector.load %arg7[%495, %c0_133, %c0_134] : memref<8x8x32xf32, #tpu.memory_space<vmem>>, vector<1x8x32xf32>
    %497 = vector.shape_cast %496 : vector<1x8x32xf32> to vector<8x32xf32>
    %498 = vector.shape_cast %490 : vector<8x32xf32> to vector<1x8x32xf32>
    tpu.vector_store %arg7[%495, %c0_133, %c0_134], %498 {strides = array<i32>} : memref<8x8x32xf32, #tpu.memory_space<vmem>>, vector<1x8x32xf32>,
    %c7_i32_135 = arith.constant 7 : i32
    %c7_i32_136 = arith.constant 7 : i32
    %499 = arith.subi %c7_i32_136, %c7_i32_135 : i32
    %500 = arith.index_cast %c7_i32_135 : i32 to index
    %c0_137 = arith.constant 0 : index
    %c0_138 = arith.constant 0 : index
    %501 = vector.load %arg8[%500, %c0_137, %c0_138] : memref<8x8x128xf32, #tpu.memory_space<vmem>>, vector<1x8x128xf32>
    %502 = vector.shape_cast %501 : vector<1x8x128xf32> to vector<8x128xf32>
    %cst_139 = arith.constant dense<0.000000e+00> : vector<8x128xf32>
    %503 = tpu.matmul %465, %13, %cst_139 {dimension_numbers = #tpu.dot_dimension_numbers<[1], [0], [0], [1], [0, 0, 1, 1], [], []>} : vector<8x32xf32>, vector<32x128xf32>, vector<8x128xf32> -> vector<8x128xf32>
    %504 = arith.addf %502, %503 : vector<8x128xf32>
    %505 = arith.index_cast %499 : i32 to index
    %c0_140 = arith.constant 0 : index
    %c0_141 = arith.constant 0 : index
    %506 = vector.load %arg9[%505, %c0_140, %c0_141] : memref<8x8x128xf32, #tpu.memory_space<vmem>>, vector<1x8x128xf32>
    %507 = vector.shape_cast %506 : vector<1x8x128xf32> to vector<8x128xf32>
    %cst_142 = arith.constant dense<0.000000e+00> : vector<8x128xf32>
    %508 = tpu.matmul %490, %14, %cst_142 {dimension_numbers = #tpu.dot_dimension_numbers<[1], [0], [0], [1], [0, 0, 1, 1], [], []>} : vector<8x32xf32>, vector<32x128xf32>, vector<8x128xf32> -> vector<8x128xf32>
    %509 = arith.addf %507, %508 : vector<8x128xf32>
    %510 = vector.extract_strided_slice %504 {offsets = [0, 0], sizes = [8, 32], strides = [1, 1]} : vector<8x128xf32> to vector<8x32xf32>
    %511 = arith.negf %510 : vector<8x32xf32>
    %512 = math.exp %511 : vector<8x32xf32>
    %cst_143 = arith.constant 1.000000e+00 : f32
    %513 = vector.broadcast %cst_143 : f32 to vector<8x32xf32>
    %514 = arith.addf %513, %512 : vector<8x32xf32>
    %515 = arith.divf %513, %514 : vector<8x32xf32>
    %516 = vector.extract_strided_slice %504 {offsets = [0, 32], sizes = [8, 32], strides = [1, 1]} : vector<8x128xf32> to vector<8x32xf32>
    %517 = arith.negf %516 : vector<8x32xf32>
    %518 = math.exp %517 : vector<8x32xf32>
    %cst_144 = arith.constant 1.000000e+00 : f32
    %519 = vector.broadcast %cst_144 : f32 to vector<8x32xf32>
    %520 = arith.addf %519, %518 : vector<8x32xf32>
    %521 = arith.divf %519, %520 : vector<8x32xf32>
    %522 = vector.extract_strided_slice %504 {offsets = [0, 64], sizes = [8, 32], strides = [1, 1]} : vector<8x128xf32> to vector<8x32xf32>
    %523 = math.tanh %522 : vector<8x32xf32>
    %524 = vector.extract_strided_slice %504 {offsets = [0, 96], sizes = [8, 32], strides = [1, 1]} : vector<8x128xf32> to vector<8x32xf32>
    %525 = arith.negf %524 : vector<8x32xf32>
    %526 = math.exp %525 : vector<8x32xf32>
    %cst_145 = arith.constant 1.000000e+00 : f32
    %527 = vector.broadcast %cst_145 : f32 to vector<8x32xf32>
    %528 = arith.addf %527, %526 : vector<8x32xf32>
    %529 = arith.divf %527, %528 : vector<8x32xf32>
    %530 = arith.mulf %521, %463 : vector<8x32xf32>
    %531 = arith.mulf %515, %523 : vector<8x32xf32>
    %532 = arith.addf %530, %531 : vector<8x32xf32>
    %533 = math.tanh %532 : vector<8x32xf32>
    %534 = arith.mulf %529, %533 : vector<8x32xf32>
    %535 = vector.extract_strided_slice %509 {offsets = [0, 0], sizes = [8, 32], strides = [1, 1]} : vector<8x128xf32> to vector<8x32xf32>
    %536 = arith.negf %535 : vector<8x32xf32>
    %537 = math.exp %536 : vector<8x32xf32>
    %cst_146 = arith.constant 1.000000e+00 : f32
    %538 = vector.broadcast %cst_146 : f32 to vector<8x32xf32>
    %539 = arith.addf %538, %537 : vector<8x32xf32>
    %540 = arith.divf %538, %539 : vector<8x32xf32>
    %541 = vector.extract_strided_slice %509 {offsets = [0, 32], sizes = [8, 32], strides = [1, 1]} : vector<8x128xf32> to vector<8x32xf32>
    %542 = arith.negf %541 : vector<8x32xf32>
    %543 = math.exp %542 : vector<8x32xf32>
    %cst_147 = arith.constant 1.000000e+00 : f32
    %544 = vector.broadcast %cst_147 : f32 to vector<8x32xf32>
    %545 = arith.addf %544, %543 : vector<8x32xf32>
    %546 = arith.divf %544, %545 : vector<8x32xf32>
    %547 = vector.extract_strided_slice %509 {offsets = [0, 64], sizes = [8, 32], strides = [1, 1]} : vector<8x128xf32> to vector<8x32xf32>
    %548 = math.tanh %547 : vector<8x32xf32>
    %549 = vector.extract_strided_slice %509 {offsets = [0, 96], sizes = [8, 32], strides = [1, 1]} : vector<8x128xf32> to vector<8x32xf32>
    %550 = arith.negf %549 : vector<8x32xf32>
    %551 = math.exp %550 : vector<8x32xf32>
    %cst_148 = arith.constant 1.000000e+00 : f32
    %552 = vector.broadcast %cst_148 : f32 to vector<8x32xf32>
    %553 = arith.addf %552, %551 : vector<8x32xf32>
    %554 = arith.divf %552, %553 : vector<8x32xf32>
    %555 = arith.mulf %546, %488 : vector<8x32xf32>
    %556 = arith.mulf %540, %548 : vector<8x32xf32>
    %557 = arith.addf %555, %556 : vector<8x32xf32>
    %558 = math.tanh %557 : vector<8x32xf32>
    %559 = arith.mulf %554, %558 : vector<8x32xf32>
    %560 = arith.index_cast %c7_i32_135 : i32 to index
    %c0_149 = arith.constant 0 : index
    %c0_150 = arith.constant 0 : index
    %561 = vector.load %arg6[%560, %c0_149, %c0_150] : memref<8x8x32xf32, #tpu.memory_space<vmem>>, vector<1x8x32xf32>
    %562 = vector.shape_cast %561 : vector<1x8x32xf32> to vector<8x32xf32>
    %563 = vector.shape_cast %534 : vector<8x32xf32> to vector<1x8x32xf32>
    tpu.vector_store %arg6[%560, %c0_149, %c0_150], %563 {strides = array<i32>} : memref<8x8x32xf32, #tpu.memory_space<vmem>>, vector<1x8x32xf32>,
    %564 = arith.index_cast %499 : i32 to index
    %c0_151 = arith.constant 0 : index
    %c0_152 = arith.constant 0 : index
    %565 = vector.load %arg7[%564, %c0_151, %c0_152] : memref<8x8x32xf32, #tpu.memory_space<vmem>>, vector<1x8x32xf32>
    %566 = vector.shape_cast %565 : vector<1x8x32xf32> to vector<8x32xf32>
    %567 = vector.shape_cast %559 : vector<8x32xf32> to vector<1x8x32xf32>
    tpu.vector_store %arg7[%564, %c0_151, %c0_152], %567 {strides = array<i32>} : memref<8x8x32xf32, #tpu.memory_space<vmem>>, vector<1x8x32xf32>,
    %c8_i32 = arith.constant 8 : i32
    return
  }
  func.func @transform_0(%arg0: i32) -> (i32, i32, i32) {
    %c0_i32 = arith.constant 0 : i32
    %c0_i32_0 = arith.constant 0 : i32
    %c0_i32_1 = arith.constant 0 : i32
    return %c0_i32, %arg0, %c0_i32_0 : i32, i32, i32
  }
  func.func @transform_1(%arg0: i32) -> (i32, i32) {
    %c0_i32 = arith.constant 0 : i32
    %c0_i32_0 = arith.constant 0 : i32
    %c0_i32_1 = arith.constant 0 : i32
    return %c0_i32, %c0_i32_0 : i32, i32
  }
  func.func @transform_2(%arg0: i32) -> (i32, i32) {
    %c0_i32 = arith.constant 0 : i32
    %c0_i32_0 = arith.constant 0 : i32
    %c0_i32_1 = arith.constant 0 : i32
    return %c0_i32, %c0_i32_0 : i32, i32
  }
  func.func @transform_3(%arg0: i32) -> (i32, i32) {
    %c0_i32 = arith.constant 0 : i32
    %c0_i32_0 = arith.constant 0 : i32
    %c0_i32_1 = arith.constant 0 : i32
    return %c0_i32, %c0_i32_0 : i32, i32
  }
  func.func @transform_4(%arg0: i32) -> (i32, i32) {
    %c0_i32 = arith.constant 0 : i32
    %c0_i32_0 = arith.constant 0 : i32
    %c0_i32_1 = arith.constant 0 : i32
    return %c0_i32, %c0_i32_0 : i32, i32
  }
  func.func @transform_5(%arg0: i32) -> (i32, i32, i32) {
    %c0_i32 = arith.constant 0 : i32
    %c0_i32_0 = arith.constant 0 : i32
    %c0_i32_1 = arith.constant 0 : i32
    return %c0_i32, %arg0, %c0_i32_0 : i32, i32, i32
  }
  func.func @transform_6(%arg0: i32) -> (i32, i32, i32) {
    %c0_i32 = arith.constant 0 : i32
    %c0_i32_0 = arith.constant 0 : i32
    %c0_i32_1 = arith.constant 0 : i32
    return %c0_i32, %arg0, %c0_i32_0 : i32, i32, i32
  }
}

</mosaic_0001>

<llo_original>
// kernel: tpu_custom_call.1
$region0: #{tpu_custom_call.1}
  #allocation0 [shape = 'u32[]', space=smem, size = 0x4, offset = 0x4, fixed_abs, tag = 'smem constant byte address 0x4 - core index']
  #allocation1 [shape = 'u32[144,128]{1,0:T(1,128)}', space=vmem, size = 0x12000, scoped, tag = 'internal scratch']
  #allocation2 [shape = 'f32[8,8,128]{2,1,0:T(8,128)}', space=vmem, size = 0x8000, scoped, tag = 'scratch operand']
  #allocation3 [shape = 'f32[8,8,128]{2,1,0:T(8,128)}', space=vmem, size = 0x8000, scoped, tag = 'scratch operand']
  %s0 = inlined_call_operand.hbm [shape: f32[8,8,16], index: 0, kind: input, shape index: {}]
  %s1 = inlined_call_operand.hbm [shape: f32[16,256], index: 1, kind: input, shape index: {}]
  %s2 = inlined_call_operand.vmem [shape: f32[1,256], index: 2, kind: input, shape index: {}]
  %s3 = inlined_call_operand.hbm [shape: f32[32,128], index: 3, kind: input, shape index: {}]
  %s4 = inlined_call_operand.hbm [shape: f32[32,128], index: 4, kind: input, shape index: {}]
  %s5 = inlined_call_operand.hbm [shape: f32[8,8,32], index: 5, kind: output, shape index: {0}]
  %s6 = inlined_call_operand.hbm [shape: f32[8,8,32], index: 6, kind: output, shape index: {1}]
  %7 = xla_tuple %s5, %s6
  %s8 = sld [smem:[#allocation0]]
  $region54: #{tpu_custom_call.1} parent=0
    _
  %s10 = ssub.s32 1, %s8
  %s11 = scalar_select 0, %s10, %s8
  $region1: #{tpu_custom_call.1} parent=0
    #allocation4 [shape = 'u8[32768]{0}', space=vmem, size = 0x8000, scoped, tag = 'input window, operand 0, single buffered']
    #allocation5 [shape = 's32[1]{0}', space=sflag, size = 0x4, scoped, tag = 'scoped memory for tpu_custom_call.1']
    #allocation6 [shape = 's32[1]{0}', space=sflag, size = 0x4, scoped, tag = 'scoped memory for tpu_custom_call.1']
    #allocation7 [shape = 'u8[16384]{0}', space=vmem, size = 0x4000, scoped, tag = 'input window, operand 1, single buffered']
    #allocation8 [shape = 's32[1]{0}', space=sflag, size = 0x4, scoped, tag = 'scoped memory for tpu_custom_call.1']
    #allocation9 [shape = 'u8[16384]{0}', space=vmem, size = 0x4000, scoped, tag = 'input window, operand 3, single buffered']
    #allocation10 [shape = 'u8[16384]{0}', space=vmem, size = 0x4000, scoped, tag = 'input window, operand 4, single buffered']
    #allocation11 [shape = 's32[1]{0}', space=sflag, size = 0x4, scoped, tag = 'scoped memory for tpu_custom_call.1']
    #allocation12 [shape = 'u8[32768]{0}', space=vmem, size = 0x8000, scoped, tag = 'output window, operand 0, single buffered']
    #allocation13 [shape = 'u8[32768]{0}', space=vmem, size = 0x8000, scoped, tag = 'output window, operand 1, single buffered']
    #allocation14 [shape = 's32[1]{0}', space=sflag, size = 0x4, scoped, tag = 'scoped memory for tpu_custom_call.1']
    %12 = vsyncpa [#allocation5], 0
    %13 = vsyncpa [#allocation8], 0
    %14 = vsyncpa [#allocation11], 0
    %15 = vsyncpa [#allocation6], 0
    %16 = vsyncpa [#allocation14], 0
    // Predicated region
    $region2: #{tpu_custom_call.1} parent=1 // pred_check
      _
    $region3: #{tpu_custom_call.1} parent=1 // pred_check_branch
      %18 = sbr.rel (0) target = $region5
    $region4: #{tpu_custom_call.1} parent=1 // pred_region
      %s20 = ssub.s32 1024, 1024
      %21 = vsyncadd [#allocation5], %s20
      %s22 = sshll.u32 [#allocation4], 4
      %s23 = int_to_ptr.vmem [resolvable:$true] %s22
      %28 = dma.hbm_to_vmem [thread:$0]  %s0, 1024, %s23, [#allocation5], 128, 128, 8
    $region5: #{tpu_custom_call.1} parent=1 // pred_fallthru
      _
    // Predicated region
    $region6: #{tpu_custom_call.1} parent=1 // pred_check
      _
    $region7: #{tpu_custom_call.1} parent=1 // pred_check_branch
      %30 = sbr.rel (0) target = $region9
    $region8: #{tpu_custom_call.1} parent=1 // pred_region
      %s32 = ssub.s32 512, 512
      %33 = vsyncadd [#allocation8], %s32
      %s34 = sshll.u32 [#allocation7], 4
      %s35 = int_to_ptr.vmem [resolvable:$true] %s34
      %40 = dma.hbm_to_vmem [thread:$0]  %s1, 512, %s35, [#allocation8], 256, 256, 16
    $region9: #{tpu_custom_call.1} parent=1 // pred_fallthru
      _
    // Predicated region
    $region10: #{tpu_custom_call.1} parent=1 // pred_check
      _
    $region11: #{tpu_custom_call.1} parent=1 // pred_check_branch
      %42 = sbr.rel (0) target = $region13
    $region12: #{tpu_custom_call.1} parent=1 // pred_region
      _
    $region13: #{tpu_custom_call.1} parent=1 // pred_fallthru
      _
    // Predicated region
    $region14: #{tpu_custom_call.1} parent=1 // pred_check
      _
    $region15: #{tpu_custom_call.1} parent=1 // pred_check_branch
      %44 = sbr.rel (0) target = $region17
    $region16: #{tpu_custom_call.1} parent=1 // pred_region
      %s46 = ssub.s32 512, 512
      %47 = vsyncadd [#allocation8], %s46
      %s48 = sshll.u32 [#allocation9], 4
      %s49 = int_to_ptr.vmem [resolvable:$true] %s48
      %54 = dma.hbm_to_vmem [thread:$0]  %s3, 512, %s49, [#allocation8], 128, 128, 8
    $region17: #{tpu_custom_call.1} parent=1 // pred_fallthru
      _
    // Predicated region
    $region18: #{tpu_custom_call.1} parent=1 // pred_check
      _
    $region19: #{tpu_custom_call.1} parent=1 // pred_check_branch
      %56 = sbr.rel (0) target = $region21
    $region20: #{tpu_custom_call.1} parent=1 // pred_region
      %s58 = ssub.s32 512, 512
      %59 = vsyncadd [#allocation11], %s58
      %s60 = sshll.u32 [#allocation10], 4
      %s61 = int_to_ptr.vmem [resolvable:$true] %s60
      %66 = dma.hbm_to_vmem [thread:$0]  %s4, 512, %s61, [#allocation11], 128, 128, 8
    $region21: #{tpu_custom_call.1} parent=1 // pred_fallthru
      _
    // Predicated region
    $region22: #{tpu_custom_call.1} parent=1 // pred_check
      _
    $region23: #{tpu_custom_call.1} parent=1 // pred_check_branch
      %68 = sbr.rel (0) target = $region25
    $region24: #{tpu_custom_call.1} parent=1 // pred_region
      %69 = dma.done [#allocation5], 1024
    $region25: #{tpu_custom_call.1} parent=1 // pred_fallthru
      _
    // Predicated region
    $region26: #{tpu_custom_call.1} parent=1 // pred_check
      _
    $region27: #{tpu_custom_call.1} parent=1 // pred_check_branch
      %71 = sbr.rel (0) target = $region29
    $region28: #{tpu_custom_call.1} parent=1 // pred_region
      %72 = dma.done [#allocation8], 512
    $region29: #{tpu_custom_call.1} parent=1 // pred_fallthru
      _
    // Predicated region
    $region30: #{tpu_custom_call.1} parent=1 // pred_check
      _
    $region31: #{tpu_custom_call.1} parent=1 // pred_check_branch
      %74 = sbr.rel (0) target = $region33
    $region32: #{tpu_custom_call.1} parent=1 // pred_region
      %75 = dma.done [#allocation8], 512
    $region33: #{tpu_custom_call.1} parent=1 // pred_fallthru
      _
    // Predicated region
    $region34: #{tpu_custom_call.1} parent=1 // pred_check
      _
    $region35: #{tpu_custom_call.1} parent=1 // pred_check_branch
      %77 = sbr.rel (0) target = $region37
    $region36: #{tpu_custom_call.1} parent=1 // pred_region
      %78 = dma.done [#allocation11], 512
    $region37: #{tpu_custom_call.1} parent=1 // pred_fallthru
      _
    %v79 = vld [vmem:[#allocation4] sm:$0xff]
    %v80 = vld [vmem:[#allocation4 + $0x8] sm:$0xff]
    %v81 = vld [vmem:[#allocation4 + $0x10] sm:$0xff]
    %v82 = vld [vmem:[#allocation4 + $0x18] sm:$0xff]
    %v83 = vld [vmem:[#allocation4 + $0x20] sm:$0xff]
    %v84 = vld [vmem:[#allocation4 + $0x28] sm:$0xff]
    %v85 = vld [vmem:[#allocation4 + $0x30] sm:$0xff]
    %v86 = vld [vmem:[#allocation4 + $0x38] sm:$0xff]
    %v87 = vld [vmem:[#allocation7] sm:$0xff]
    %v88 = vld [vmem:[#allocation7 + $0x8] sm:$0xff]
    %v89 = vld [vmem:[#allocation7 + $0x10] sm:$0xff]
    %v90 = vld [vmem:[#allocation7 + $0x18] sm:$0xff]
    %v91 = vld [vmem:[%s2] sm:$0x3]
    %v93 = vlaneseq
    %v94 = vshrl.u32 %v93, 7
    %v95 = vsub.s32 0, %v94
    %v96 = vrot.slane %v91, %v95
    %v97 = vlaneseq
    %v98 = vshrl.u32 %v97, 7
    %v99 = vsub.s32 1, %v98
    %v100 = vrot.slane %v91, %v99
    %vm103 = vcmask 130048
    %v105 = vsel %vm103, %v79, 0
    %v108 = vsel %vm103, %v80, 0
    %v111 = vsel %vm103, %v81, 0
    %v114 = vsel %vm103, %v82, 0
    %v117 = vsel %vm103, %v83, 0
    %v120 = vsel %vm103, %v84, 0
    %v123 = vsel %vm103, %v85, 0
    %v126 = vsel %vm103, %v86, 0
    %128 = vmatprep.subr.mxu0 0.0
    %129 = vmatpush1.msra.mxu0 0.0
    %130 = vmatprep.subr.mxu0 0.0
    %131 = vmatpush1.msra.mxu0 0.0
    %132 = vmatprep.subr.mxu0 0.0
    %133 = vmatpush1.msra.mxu0 0.0
    %134 = vmatprep.subr.mxu0 0.0
    %135 = vmatpush1.msra.mxu0 0.0
    %136 = vmatprep.subr.mxu0 0.0
    %137 = vmatpush1.msra.mxu0 0.0
    %138 = vmatprep.subr.mxu0 0.0
    %139 = vmatpush1.msra.mxu0 0.0
    %140 = vmatprep.subr.mxu0 0.0
    %141 = vmatpush1.msra.mxu0 0.0
    %142 = vmatprep.subr.mxu0 0.0
    %143 = vmatpush1.msra.mxu0 0.0
    %144 = vmatprep.subr.mxu0 0.0
    %145 = vmatpush1.msra.mxu0 0.0
    %146 = vmatprep.subr.mxu0 0.0
    %147 = vmatpush1.msra.mxu0 0.0
    %148 = vmatprep.subr.mxu0 0.0
    %149 = vmatpush1.msra.mxu0 0.0
    %150 = vmatprep.subr.mxu0 0.0
    %151 = vmatpush1.msra.mxu0 0.0
    %152 = vmatprep.subr.mxu0 0.0
    %153 = vmatpush1.msra.mxu0 0.0
    %154 = vmatprep.subr.mxu0 0.0
    %155 = vmatpush1.msra.mxu0 0.0
    %156 = vmatprep.subr.mxu0 %v90
    %157 = vmatpush1.msra.mxu0 %v89
    %158 = vmatprep.subr.mxu0 %v88
    %159 = vmatpush1.msra.mxu0 %v87
    %160 = vmatprep.subr.mxu0 0.0
    %161 = vmatpush2.msra.mxu0 0.0
    %162 = vmatprep.subr.mxu0 0.0
    %163 = vmatpush2.msra.mxu0 0.0
    %164 = vmatprep.subr.mxu0 0.0
    %165 = vmatpush2.msra.mxu0 0.0
    %166 = vmatprep.subr.mxu0 0.0
    %167 = vmatpush2.msra.mxu0 0.0
    %168 = vmatprep.subr.mxu0 0.0
    %169 = vmatpush2.msra.mxu0 0.0
    %170 = vmatprep.subr.mxu0 0.0
    %171 = vmatpush2.msra.mxu0 0.0
    %172 = vmatprep.subr.mxu0 0.0
    %173 = vmatpush2.msra.mxu0 0.0
    %174 = vmatprep.subr.mxu0 0.0
    %175 = vmatpush2.msra.mxu0 0.0
    %176 = vmatprep.subr.mxu0 0.0
    %177 = vmatpush2.msra.mxu0 0.0
    %178 = vmatprep.subr.mxu0 0.0
    %179 = vmatpush2.msra.mxu0 0.0
    %180 = vmatprep.subr.mxu0 0.0
    %181 = vmatpush2.msra.mxu0 0.0
    %182 = vmatprep.subr.mxu0 0.0
    %183 = vmatpush2.msra.mxu0 0.0
    %184 = vmatprep.subr.mxu0 0.0
    %185 = vmatpush2.msra.mxu0 0.0
    %186 = vmatprep.subr.mxu0 0.0
    %187 = vmatpush2.msra.mxu0 0.0
    %188 = vmatprep.subr.mxu0 0.0
    %189 = vmatpush2.msra.mxu0 0.0
    %190 = vmatprep.subr.mxu0 0.0
    %191 = vmatpush2.msra.mxu0 0.0
    %192 = vmatprep.mubr.f32.mxu0 0.0
    %193 = vmatmul.mubr.f32.gmra.mxu0 %v105
    %v194 = vpop.f32.mrf.mxu0
    %v195 = vadd.f32 %v96, %v194
    %v196 = vpop.f32.mrf.mxu0
    %v197 = vadd.f32 %v100, %v196
    %198 = vmatprep.mubr.f32.mxu0 0.0
    %199 = vmatmul.mubr.f32.gmra.mxu0 %v108
    %v200 = vpop.f32.mrf.mxu0
    %v201 = vadd.f32 %v96, %v200
    %v202 = vpop.f32.mrf.mxu0
    %v203 = vadd.f32 %v100, %v202
    %204 = vmatprep.mubr.f32.mxu0 0.0
    %205 = vmatmul.mubr.f32.gmra.mxu0 %v111
    %v206 = vpop.f32.mrf.mxu0
    %v207 = vadd.f32 %v96, %v206
    %v208 = vpop.f32.mrf.mxu0
    %v209 = vadd.f32 %v100, %v208
    %210 = vmatprep.mubr.f32.mxu0 0.0
    %211 = vmatmul.mubr.f32.gmra.mxu0 %v114
    %v212 = vpop.f32.mrf.mxu0
    %v213 = vadd.f32 %v96, %v212
    %v214 = vpop.f32.mrf.mxu0
    %v215 = vadd.f32 %v100, %v214
    %216 = vmatprep.mubr.f32.mxu0 0.0
    %217 = vmatmul.mubr.f32.gmra.mxu0 %v117
    %v218 = vpop.f32.mrf.mxu0
    %v219 = vadd.f32 %v96, %v218
    %v220 = vpop.f32.mrf.mxu0
    %v221 = vadd.f32 %v100, %v220
    %222 = vmatprep.mubr.f32.mxu0 0.0
    %223 = vmatmul.mubr.f32.gmra.mxu0 %v120
    %v224 = vpop.f32.mrf.mxu0
    %v225 = vadd.f32 %v96, %v224
    %v226 = vpop.f32.mrf.mxu0
    %v227 = vadd.f32 %v100, %v226
    %228 = vmatprep.mubr.f32.mxu0 0.0
    %229 = vmatmul.mubr.f32.gmra.mxu0 %v123
    %v230 = vpop.f32.mrf.mxu0
    %v231 = vadd.f32 %v96, %v230
    %v232 = vpop.f32.mrf.mxu0
    %v233 = vadd.f32 %v100, %v232
    %234 = vmatprep.mubr.f32.mxu0 0.0
    %235 = vmatmul.mubr.f32.gmra.mxu0 %v126
    %v236 = vpop.f32.mrf.mxu0
    %v237 = vadd.f32 %v96, %v236
    %v238 = vpop.f32.mrf.mxu0
    %v239 = vadd.f32 %v100, %v238
    %240 = vdwg.mxu0
    %241 = vst [vmem:[#allocation2] sm:$0xff] %v195
    %242 = vst [vmem:[#allocation2 + $0x8] sm:$0xff] %v201
    %243 = vst [vmem:[#allocation2 + $0x10] sm:$0xff] %v207
    %244 = vst [vmem:[#allocation2 + $0x18] sm:$0xff] %v213
    %245 = vst [vmem:[#allocation2 + $0x20] sm:$0xff] %v219
    %246 = vst [vmem:[#allocation2 + $0x28] sm:$0xff] %v225
    %247 = vst [vmem:[#allocation2 + $0x30] sm:$0xff] %v231
    %248 = vst [vmem:[#allocation2 + $0x38] sm:$0xff] %v237
    %249 = vst [vmem:[#allocation3] sm:$0xff] %v197
    %250 = vst [vmem:[#allocation3 + $0x8] sm:$0xff] %v203
    %251 = vst [vmem:[#allocation3 + $0x10] sm:$0xff] %v209
    %252 = vst [vmem:[#allocation3 + $0x18] sm:$0xff] %v215
    %253 = vst [vmem:[#allocation3 + $0x20] sm:$0xff] %v221
    %254 = vst [vmem:[#allocation3 + $0x28] sm:$0xff] %v227
    %255 = vst [vmem:[#allocation3 + $0x30] sm:$0xff] %v233
    %256 = vst [vmem:[#allocation3 + $0x38] sm:$0xff] %v239
    %v257 = vld [vmem:[#allocation9] sm:$0xff]
    %v258 = vld [vmem:[#allocation9 + $0x8] sm:$0xff]
    %v259 = vld [vmem:[#allocation9 + $0x10] sm:$0xff]
    %v260 = vld [vmem:[#allocation9 + $0x18] sm:$0xff]
    %v261 = vld [vmem:[#allocation10] sm:$0xff]
    %v262 = vld [vmem:[#allocation10 + $0x8] sm:$0xff]
    %v263 = vld [vmem:[#allocation10 + $0x10] sm:$0xff]
    %v264 = vld [vmem:[#allocation10 + $0x18] sm:$0xff]
    %v265 = vld [vmem:[#allocation2] sm:$0xff]
    %vm266 = vcmask 261120
    %v268 = vsel %vm266, 0.0, 0
    %270 = vmatprep.subr.mxu0 0.0
    %271 = vmatpush1.msra.mxu0 0.0
    %272 = vmatprep.subr.mxu0 0.0
    %273 = vmatpush1.msra.mxu0 0.0
    %274 = vmatprep.subr.mxu0 0.0
    %275 = vmatpush1.msra.mxu0 0.0
    %276 = vmatprep.subr.mxu0 0.0
    %277 = vmatpush1.msra.mxu0 0.0
    %278 = vmatprep.subr.mxu0 0.0
    %279 = vmatpush1.msra.mxu0 0.0
    %280 = vmatprep.subr.mxu0 0.0
    %281 = vmatpush1.msra.mxu0 0.0
    %282 = vmatprep.subr.mxu0 0.0
    %283 = vmatpush1.msra.mxu0 0.0
    %284 = vmatprep.subr.mxu0 0.0
    %285 = vmatpush1.msra.mxu0 0.0
    %286 = vmatprep.subr.mxu0 0.0
    %287 = vmatpush1.msra.mxu0 0.0
    %288 = vmatprep.subr.mxu0 0.0
    %289 = vmatpush1.msra.mxu0 0.0
    %290 = vmatprep.subr.mxu0 0.0
    %291 = vmatpush1.msra.mxu0 0.0
    %292 = vmatprep.subr.mxu0 0.0
    %293 = vmatpush1.msra.mxu0 0.0
    %294 = vmatprep.subr.mxu0 0.0
    %295 = vmatpush1.msra.mxu0 %v260
    %296 = vmatprep.subr.mxu0 0.0
    %297 = vmatpush1.msra.mxu0 %v259
    %298 = vmatprep.subr.mxu0 0.0
    %299 = vmatpush1.msra.mxu0 %v258
    %300 = vmatprep.subr.mxu0 0.0
    %301 = vmatpush1.msra.mxu0 %v257
    %302 = vmatprep.subr.mxu0 0.0
    %303 = vmatpush2.msra.mxu0 0.0
    %304 = vmatprep.subr.mxu0 0.0
    %305 = vmatpush2.msra.mxu0 0.0
    %306 = vmatprep.subr.mxu0 0.0
    %307 = vmatpush2.msra.mxu0 0.0
    %308 = vmatprep.subr.mxu0 0.0
    %309 = vmatpush2.msra.mxu0 0.0
    %310 = vmatprep.subr.mxu0 0.0
    %311 = vmatpush2.msra.mxu0 0.0
    %312 = vmatprep.subr.mxu0 0.0
    %313 = vmatpush2.msra.mxu0 0.0
    %314 = vmatprep.subr.mxu0 0.0
    %315 = vmatpush2.msra.mxu0 0.0
    %316 = vmatprep.subr.mxu0 0.0
    %317 = vmatpush2.msra.mxu0 0.0
    %318 = vmatprep.subr.mxu0 0.0
    %319 = vmatpush2.msra.mxu0 0.0
    %320 = vmatprep.subr.mxu0 0.0
    %321 = vmatpush2.msra.mxu0 0.0
    %322 = vmatprep.subr.mxu0 0.0
    %323 = vmatpush2.msra.mxu0 0.0
    %324 = vmatprep.subr.mxu0 0.0
    %325 = vmatpush2.msra.mxu0 0.0
    %326 = vmatprep.subr.mxu0 0.0
    %327 = vmatpush2.msra.mxu0 0.0
    %328 = vmatprep.subr.mxu0 0.0
    %329 = vmatpush2.msra.mxu0 0.0
    %330 = vmatprep.subr.mxu0 0.0
    %331 = vmatpush2.msra.mxu0 0.0
    %332 = vmatprep.subr.mxu0 0.0
    %333 = vmatpush2.msra.mxu0 0.0
    %334 = vmatprep.mubr.f32.mxu0 0.0
    %335 = vmatmul.mubr.f32.gmra.mxu0 %v268
    %v336 = vpop.f32.mrf.mxu0
    %v337 = vadd.f32 0.0, %v336
    %v338 = vpop.f32.mrf.mxu0
    %339 = vdwg.mxu0
    %v340 = vadd.f32 %v265, %v337
    %s341 = scalar_lea.vmem [#allocation3], 56
    %v342 = vld [vmem:[%s341] sm:$0xff]
    %343 = vmatprep.subr.mxu0 0.0
    %344 = vmatpush1.msra.mxu0 0.0
    %345 = vmatprep.subr.mxu0 0.0
    %346 = vmatpush1.msra.mxu0 0.0
    %347 = vmatprep.subr.mxu0 0.0
    %348 = vmatpush1.msra.mxu0 0.0
    %349 = vmatprep.subr.mxu0 0.0
    %350 = vmatpush1.msra.mxu0 0.0
    %351 = vmatprep.subr.mxu0 0.0
    %352 = vmatpush1.msra.mxu0 0.0
    %353 = vmatprep.subr.mxu0 0.0
    %354 = vmatpush1.msra.mxu0 0.0
    %355 = vmatprep.subr.mxu0 0.0
    %356 = vmatpush1.msra.mxu0 0.0
    %357 = vmatprep.subr.mxu0 0.0
    %358 = vmatpush1.msra.mxu0 0.0
    %359 = vmatprep.subr.mxu0 0.0
    %360 = vmatpush1.msra.mxu0 0.0
    %361 = vmatprep.subr.mxu0 0.0
    %362 = vmatpush1.msra.mxu0 0.0
    %363 = vmatprep.subr.mxu0 0.0
    %364 = vmatpush1.msra.mxu0 0.0
    %365 = vmatprep.subr.mxu0 0.0
    %366 = vmatpush1.msra.mxu0 0.0
    %367 = vmatprep.subr.mxu0 0.0
    %368 = vmatpush1.msra.mxu0 %v264
    %369 = vmatprep.subr.mxu0 0.0
    %370 = vmatpush1.msra.mxu0 %v263
    %371 = vmatprep.subr.mxu0 0.0
    %372 = vmatpush1.msra.mxu0 %v262
    %373 = vmatprep.subr.mxu0 0.0
    %374 = vmatpush1.msra.mxu0 %v261
    %375 = vmatprep.subr.mxu0 0.0
    %376 = vmatpush2.msra.mxu0 0.0
    %377 = vmatprep.subr.mxu0 0.0
    %378 = vmatpush2.msra.mxu0 0.0
    %379 = vmatprep.subr.mxu0 0.0
    %380 = vmatpush2.msra.mxu0 0.0
    %381 = vmatprep.subr.mxu0 0.0
    %382 = vmatpush2.msra.mxu0 0.0
    %383 = vmatprep.subr.mxu0 0.0
    %384 = vmatpush2.msra.mxu0 0.0
    %385 = vmatprep.subr.mxu0 0.0
    %386 = vmatpush2.msra.mxu0 0.0
    %387 = vmatprep.subr.mxu0 0.0
    %388 = vmatpush2.msra.mxu0 0.0
    %389 = vmatprep.subr.mxu0 0.0
    %390 = vmatpush2.msra.mxu0 0.0
    %391 = vmatprep.subr.mxu0 0.0
    %392 = vmatpush2.msra.mxu0 0.0
    %393 = vmatprep.subr.mxu0 0.0
    %394 = vmatpush2.msra.mxu0 0.0
    %395 = vmatprep.subr.mxu0 0.0
    %396 = vmatpush2.msra.mxu0 0.0
    %397 = vmatprep.subr.mxu0 0.0
    %398 = vmatpush2.msra.mxu0 0.0
    %399 = vmatprep.subr.mxu0 0.0
    %400 = vmatpush2.msra.mxu0 0.0
    %401 = vmatprep.subr.mxu0 0.0
    %402 = vmatpush2.msra.mxu0 0.0
    %403 = vmatprep.subr.mxu0 0.0
    %404 = vmatpush2.msra.mxu0 0.0
    %405 = vmatprep.subr.mxu0 0.0
    %406 = vmatpush2.msra.mxu0 0.0
    %407 = vmatprep.mubr.f32.mxu0 0.0
    %408 = vmatmul.mubr.f32.gmra.mxu0 %v268
    %v409 = vpop.f32.mrf.mxu0
    %v410 = vadd.f32 0.0, %v409
    %v411 = vpop.f32.mrf.mxu0
    %412 = vdwg.mxu0
    %v413 = vadd.f32 %v342, %v410
    %v414 = vxor.u32 %v340, 2147483648
    %v415 = vmul.f32 %v414, 1.442695
    %v416 = vpow.pop %v415
    %v417 = vadd.f32 %v416, 1.0
    %v418 = vrcp.pop %v417
    %v419 = vmul.f32 1.0, %v418
    %v420 = vtanh.pop %v340
    %v421 = vmul.f32 %v419, 0.0
    %423 = vrot.lane.b32.xlu0 %v420, 64
    %v424 = vpop.permute.xlu0 %423
    %v426 = vmul.f32 %v419, %v424
    %428 = vrot.lane.b32.xlu0 %v426, 32
    %v429 = vpop.permute.xlu0 %428
    %v431 = vadd.f32 %v421, %v429
    %v432 = vtanh.pop %v431
    %434 = vrot.lane.b32.xlu0 %v432, 64
    %v435 = vpop.permute.xlu0 %434
    %v437 = vmul.f32 %v419, %v435
    %v438 = vxor.u32 %v413, 2147483648
    %v439 = vmul.f32 %v438, 1.442695
    %v440 = vpow.pop %v439
    %v441 = vadd.f32 %v440, 1.0
    %v442 = vrcp.pop %v441
    %v443 = vmul.f32 1.0, %v442
    %v444 = vtanh.pop %v413
    %v445 = vmul.f32 %v443, 0.0
    %447 = vrot.lane.b32.xlu0 %v444, 64
    %v448 = vpop.permute.xlu0 %447
    %v450 = vmul.f32 %v443, %v448
    %452 = vrot.lane.b32.xlu0 %v450, 32
    %v453 = vpop.permute.xlu0 %452
    %v455 = vadd.f32 %v445, %v453
    %v456 = vtanh.pop %v455
    %458 = vrot.lane.b32.xlu0 %v456, 64
    %v459 = vpop.permute.xlu0 %458
    %v461 = vmul.f32 %v443, %v459
    %463 = vrot.lane.b32.xlu0 %v437, 32
    %v464 = vpop.permute.xlu0 %463
    %466 = vst.msk [vmem:[#allocation12] sm:$0xff] %vm266, %v464
    %468 = vrot.lane.b32.xlu0 %v461, 32
    %v469 = vpop.permute.xlu0 %468
    %s471 = scalar_lea.vmem [#allocation13], 56
    %472 = vst.msk [vmem:[%s471] sm:$0xff] %vm266, %v469
    %s473 = scalar_lea.vmem [#allocation2], 8
    %v474 = vld [vmem:[%s473] sm:$0xff]
    %v475 = vsel %vm266, %v464, 0
    %477 = vmatprep.subr.mxu0 0.0
    %478 = vmatpush1.msra.mxu0 0.0
    %479 = vmatprep.subr.mxu0 0.0
    %480 = vmatpush1.msra.mxu0 0.0
    %481 = vmatprep.subr.mxu0 0.0
    %482 = vmatpush1.msra.mxu0 0.0
    %483 = vmatprep.subr.mxu0 0.0
    %484 = vmatpush1.msra.mxu0 0.0
    %485 = vmatprep.subr.mxu0 0.0
    %486 = vmatpush1.msra.mxu0 0.0
    %487 = vmatprep.subr.mxu0 0.0
    %488 = vmatpush1.msra.mxu0 0.0
    %489 = vmatprep.subr.mxu0 0.0
    %490 = vmatpush1.msra.mxu0 0.0
    %491 = vmatprep.subr.mxu0 0.0
    %492 = vmatpush1.msra.mxu0 0.0
    %493 = vmatprep.subr.mxu0 0.0
    %494 = vmatpush1.msra.mxu0 0.0
    %495 = vmatprep.subr.mxu0 0.0
    %496 = vmatpush1.msra.mxu0 0.0
    %497 = vmatprep.subr.mxu0 0.0
    %498 = vmatpush1.msra.mxu0 0.0
    %499 = vmatprep.subr.mxu0 0.0
    %500 = vmatpush1.msra.mxu0 0.0
    %501 = vmatprep.subr.mxu0 0.0
    %502 = vmatpush1.msra.mxu0 %v260
    %503 = vmatprep.subr.mxu0 0.0
    %504 = vmatpush1.msra.mxu0 %v259
    %505 = vmatprep.subr.mxu0 0.0
    %506 = vmatpush1.msra.mxu0 %v258
    %507 = vmatprep.subr.mxu0 0.0
    %508 = vmatpush1.msra.mxu0 %v257
    %509 = vmatprep.subr.mxu0 0.0
    %510 = vmatpush2.msra.mxu0 0.0
    %511 = vmatprep.subr.mxu0 0.0
    %512 = vmatpush2.msra.mxu0 0.0
    %513 = vmatprep.subr.mxu0 0.0
    %514 = vmatpush2.msra.mxu0 0.0
    %515 = vmatprep.subr.mxu0 0.0
    %516 = vmatpush2.msra.mxu0 0.0
    %517 = vmatprep.subr.mxu0 0.0
    %518 = vmatpush2.msra.mxu0 0.0
    %519 = vmatprep.subr.mxu0 0.0
    %520 = vmatpush2.msra.mxu0 0.0
    %521 = vmatprep.subr.mxu0 0.0
    %522 = vmatpush2.msra.mxu0 0.0
    %523 = vmatprep.subr.mxu0 0.0
    %524 = vmatpush2.msra.mxu0 0.0
    %525 = vmatprep.subr.mxu0 0.0
    %526 = vmatpush2.msra.mxu0 0.0
    %527 = vmatprep.subr.mxu0 0.0
    %528 = vmatpush2.msra.mxu0 0.0
    %529 = vmatprep.subr.mxu0 0.0
    %530 = vmatpush2.msra.mxu0 0.0
    %531 = vmatprep.subr.mxu0 0.0
    %532 = vmatpush2.msra.mxu0 0.0
    %533 = vmatprep.subr.mxu0 0.0
    %534 = vmatpush2.msra.mxu0 0.0
    %535 = vmatprep.subr.mxu0 0.0
    %536 = vmatpush2.msra.mxu0 0.0
    %537 = vmatprep.subr.mxu0 0.0
    %538 = vmatpush2.msra.mxu0 0.0
    %539 = vmatprep.subr.mxu0 0.0
    %540 = vmatpush2.msra.mxu0 0.0
    %541 = vmatprep.mubr.f32.mxu0 0.0
    %542 = vmatmul.mubr.f32.gmra.mxu0 %v475
    %v543 = vpop.f32.mrf.mxu0
    %v544 = vadd.f32 0.0, %v543
    %v545 = vpop.f32.mrf.mxu0
    %546 = vdwg.mxu0
    %v547 = vadd.f32 %v474, %v544
    %s548 = scalar_lea.vmem [#allocation3], 48
    %v549 = vld [vmem:[%s548] sm:$0xff]
    %v550 = vsel %vm266, %v469, 0
    %552 = vmatprep.subr.mxu0 0.0
    %553 = vmatpush1.msra.mxu0 0.0
    %554 = vmatprep.subr.mxu0 0.0
    %555 = vmatpush1.msra.mxu0 0.0
    %556 = vmatprep.subr.mxu0 0.0
    %557 = vmatpush1.msra.mxu0 0.0
    %558 = vmatprep.subr.mxu0 0.0
    %559 = vmatpush1.msra.mxu0 0.0
    %560 = vmatprep.subr.mxu0 0.0
    %561 = vmatpush1.msra.mxu0 0.0
    %562 = vmatprep.subr.mxu0 0.0
    %563 = vmatpush1.msra.mxu0 0.0
    %564 = vmatprep.subr.mxu0 0.0
    %565 = vmatpush1.msra.mxu0 0.0
    %566 = vmatprep.subr.mxu0 0.0
    %567 = vmatpush1.msra.mxu0 0.0
    %568 = vmatprep.subr.mxu0 0.0
    %569 = vmatpush1.msra.mxu0 0.0
    %570 = vmatprep.subr.mxu0 0.0
    %571 = vmatpush1.msra.mxu0 0.0
    %572 = vmatprep.subr.mxu0 0.0
    %573 = vmatpush1.msra.mxu0 0.0
    %574 = vmatprep.subr.mxu0 0.0
    %575 = vmatpush1.msra.mxu0 0.0
    %576 = vmatprep.subr.mxu0 0.0
    %577 = vmatpush1.msra.mxu0 %v264
    %578 = vmatprep.subr.mxu0 0.0
    %579 = vmatpush1.msra.mxu0 %v263
    %580 = vmatprep.subr.mxu0 0.0
    %581 = vmatpush1.msra.mxu0 %v262
    %582 = vmatprep.subr.mxu0 0.0
    %583 = vmatpush1.msra.mxu0 %v261
    %584 = vmatprep.subr.mxu0 0.0
    %585 = vmatpush2.msra.mxu0 0.0
    %586 = vmatprep.subr.mxu0 0.0
    %587 = vmatpush2.msra.mxu0 0.0
    %588 = vmatprep.subr.mxu0 0.0
    %589 = vmatpush2.msra.mxu0 0.0
    %590 = vmatprep.subr.mxu0 0.0
    %591 = vmatpush2.msra.mxu0 0.0
    %592 = vmatprep.subr.mxu0 0.0
    %593 = vmatpush2.msra.mxu0 0.0
    %594 = vmatprep.subr.mxu0 0.0
    %595 = vmatpush2.msra.mxu0 0.0
    %596 = vmatprep.subr.mxu0 0.0
    %597 = vmatpush2.msra.mxu0 0.0
    %598 = vmatprep.subr.mxu0 0.0
    %599 = vmatpush2.msra.mxu0 0.0
    %600 = vmatprep.subr.mxu0 0.0
    %601 = vmatpush2.msra.mxu0 0.0
    %602 = vmatprep.subr.mxu0 0.0
    %603 = vmatpush2.msra.mxu0 0.0
    %604 = vmatprep.subr.mxu0 0.0
    %605 = vmatpush2.msra.mxu0 0.0
    %606 = vmatprep.subr.mxu0 0.0
    %607 = vmatpush2.msra.mxu0 0.0
    %608 = vmatprep.subr.mxu0 0.0
    %609 = vmatpush2.msra.mxu0 0.0
    %610 = vmatprep.subr.mxu0 0.0
    %611 = vmatpush2.msra.mxu0 0.0
    %612 = vmatprep.subr.mxu0 0.0
    %613 = vmatpush2.msra.mxu0 0.0
    %614 = vmatprep.subr.mxu0 0.0
    %615 = vmatpush2.msra.mxu0 0.0
    %616 = vmatprep.mubr.f32.mxu0 0.0
    %617 = vmatmul.mubr.f32.gmra.mxu0 %v550
    %v618 = vpop.f32.mrf.mxu0
    %v619 = vadd.f32 0.0, %v618
    %v620 = vpop.f32.mrf.mxu0
    %621 = vdwg.mxu0
    %v622 = vadd.f32 %v549, %v619
    %v623 = vxor.u32 %v547, 2147483648
    %v624 = vmul.f32 %v623, 1.442695
    %v625 = vpow.pop %v624
    %v626 = vadd.f32 %v625, 1.0
    %v627 = vrcp.pop %v626
    %v628 = vmul.f32 1.0, %v627
    %v629 = vtanh.pop %v547
    %v630 = vmul.f32 %v628, %v431
    %632 = vrot.lane.b32.xlu0 %v629, 64
    %v633 = vpop.permute.xlu0 %632
    %v635 = vmul.f32 %v628, %v633
    %637 = vrot.lane.b32.xlu0 %v635, 32
    %v638 = vpop.permute.xlu0 %637
    %v640 = vadd.f32 %v630, %v638
    %v641 = vtanh.pop %v640
    %643 = vrot.lane.b32.xlu0 %v641, 64
    %v644 = vpop.permute.xlu0 %643
    %v646 = vmul.f32 %v628, %v644
    %v647 = vxor.u32 %v622, 2147483648
    %v648 = vmul.f32 %v647, 1.442695
    %v649 = vpow.pop %v648
    %v650 = vadd.f32 %v649, 1.0
    %v651 = vrcp.pop %v650
    %v652 = vmul.f32 1.0, %v651
    %v653 = vtanh.pop %v622
    %v654 = vmul.f32 %v652, %v455
    %656 = vrot.lane.b32.xlu0 %v653, 64
    %v657 = vpop.permute.xlu0 %656
    %v659 = vmul.f32 %v652, %v657
    %661 = vrot.lane.b32.xlu0 %v659, 32
    %v662 = vpop.permute.xlu0 %661
    %v664 = vadd.f32 %v654, %v662
    %v665 = vtanh.pop %v664
    %667 = vrot.lane.b32.xlu0 %v665, 64
    %v668 = vpop.permute.xlu0 %667
    %v670 = vmul.f32 %v652, %v668
    %672 = vrot.lane.b32.xlu0 %v646, 32
    %v673 = vpop.permute.xlu0 %672
    %s675 = scalar_lea.vmem [#allocation12], 8
    %676 = vst.msk [vmem:[%s675] sm:$0xff] %vm266, %v673
    %678 = vrot.lane.b32.xlu0 %v670, 32
    %v679 = vpop.permute.xlu0 %678
    %s681 = scalar_lea.vmem [#allocation13], 48
    %682 = vst.msk [vmem:[%s681] sm:$0xff] %vm266, %v679
    %s683 = scalar_lea.vmem [#allocation2], 16
    %v684 = vld [vmem:[%s683] sm:$0xff]
    %v685 = vsel %vm266, %v673, 0
    %687 = vmatprep.subr.mxu0 0.0
    %688 = vmatpush1.msra.mxu0 0.0
    %689 = vmatprep.subr.mxu0 0.0
    %690 = vmatpush1.msra.mxu0 0.0
    %691 = vmatprep.subr.mxu0 0.0
    %692 = vmatpush1.msra.mxu0 0.0
    %693 = vmatprep.subr.mxu0 0.0
    %694 = vmatpush1.msra.mxu0 0.0
    %695 = vmatprep.subr.mxu0 0.0
    %696 = vmatpush1.msra.mxu0 0.0
    %697 = vmatprep.subr.mxu0 0.0
    %698 = vmatpush1.msra.mxu0 0.0
    %699 = vmatprep.subr.mxu0 0.0
    %700 = vmatpush1.msra.mxu0 0.0
    %701 = vmatprep.subr.mxu0 0.0
    %702 = vmatpush1.msra.mxu0 0.0
    %703 = vmatprep.subr.mxu0 0.0
    %704 = vmatpush1.msra.mxu0 0.0
    %705 = vmatprep.subr.mxu0 0.0
    %706 = vmatpush1.msra.mxu0 0.0
    %707 = vmatprep.subr.mxu0 0.0
    %708 = vmatpush1.msra.mxu0 0.0
    %709 = vmatprep.subr.mxu0 0.0
    %710 = vmatpush1.msra.mxu0 0.0
    %711 = vmatprep.subr.mxu0 0.0
    %712 = vmatpush1.msra.mxu0 %v260
    %713 = vmatprep.subr.mxu0 0.0
    %714 = vmatpush1.msra.mxu0 %v259
    %715 = vmatprep.subr.mxu0 0.0
    %716 = vmatpush1.msra.mxu0 %v258
    %717 = vmatprep.subr.mxu0 0.0
    %718 = vmatpush1.msra.mxu0 %v257
    %719 = vmatprep.subr.mxu0 0.0
    %720 = vmatpush2.msra.mxu0 0.0
    %721 = vmatprep.subr.mxu0 0.0
    %722 = vmatpush2.msra.mxu0 0.0
    %723 = vmatprep.subr.mxu0 0.0
    %724 = vmatpush2.msra.mxu0 0.0
    %725 = vmatprep.subr.mxu0 0.0
    %726 = vmatpush2.msra.mxu0 0.0
    %727 = vmatprep.subr.mxu0 0.0
    %728 = vmatpush2.msra.mxu0 0.0
    %729 = vmatprep.subr.mxu0 0.0
    %730 = vmatpush2.msra.mxu0 0.0
    %731 = vmatprep.subr.mxu0 0.0
    %732 = vmatpush2.msra.mxu0 0.0
    %733 = vmatprep.subr.mxu0 0.0
    %734 = vmatpush2.msra.mxu0 0.0
    %735 = vmatprep.subr.mxu0 0.0
    %736 = vmatpush2.msra.mxu0 0.0
    %737 = vmatprep.subr.mxu0 0.0
    %738 = vmatpush2.msra.mxu0 0.0
    %739 = vmatprep.subr.mxu0 0.0
    %740 = vmatpush2.msra.mxu0 0.0
    %741 = vmatprep.subr.mxu0 0.0
    %742 = vmatpush2.msra.mxu0 0.0
    %743 = vmatprep.subr.mxu0 0.0
    %744 = vmatpush2.msra.mxu0 0.0
    %745 = vmatprep.subr.mxu0 0.0
    %746 = vmatpush2.msra.mxu0 0.0
    %747 = vmatprep.subr.mxu0 0.0
    %748 = vmatpush2.msra.mxu0 0.0
    %749 = vmatprep.subr.mxu0 0.0
    %750 = vmatpush2.msra.mxu0 0.0
    %751 = vmatprep.mubr.f32.mxu0 0.0
    %752 = vmatmul.mubr.f32.gmra.mxu0 %v685
    %v753 = vpop.f32.mrf.mxu0
    %v754 = vadd.f32 0.0, %v753
    %v755 = vpop.f32.mrf.mxu0
    %756 = vdwg.mxu0
    %v757 = vadd.f32 %v684, %v754
    %s758 = scalar_lea.vmem [#allocation3], 40
    %v759 = vld [vmem:[%s758] sm:$0xff]
    %v760 = vsel %vm266, %v679, 0
    %762 = vmatprep.subr.mxu0 0.0
    %763 = vmatpush1.msra.mxu0 0.0
    %764 = vmatprep.subr.mxu0 0.0
    %765 = vmatpush1.msra.mxu0 0.0
    %766 = vmatprep.subr.mxu0 0.0
    %767 = vmatpush1.msra.mxu0 0.0
    %768 = vmatprep.subr.mxu0 0.0
    %769 = vmatpush1.msra.mxu0 0.0
    %770 = vmatprep.subr.mxu0 0.0
    %771 = vmatpush1.msra.mxu0 0.0
    %772 = vmatprep.subr.mxu0 0.0
    %773 = vmatpush1.msra.mxu0 0.0
    %774 = vmatprep.subr.mxu0 0.0
    %775 = vmatpush1.msra.mxu0 0.0
    %776 = vmatprep.subr.mxu0 0.0
    %777 = vmatpush1.msra.mxu0 0.0
    %778 = vmatprep.subr.mxu0 0.0
    %779 = vmatpush1.msra.mxu0 0.0
    %780 = vmatprep.subr.mxu0 0.0
    %781 = vmatpush1.msra.mxu0 0.0
    %782 = vmatprep.subr.mxu0 0.0
    %783 = vmatpush1.msra.mxu0 0.0
    %784 = vmatprep.subr.mxu0 0.0
    %785 = vmatpush1.msra.mxu0 0.0
    %786 = vmatprep.subr.mxu0 0.0
    %787 = vmatpush1.msra.mxu0 %v264
    %788 = vmatprep.subr.mxu0 0.0
    %789 = vmatpush1.msra.mxu0 %v263
    %790 = vmatprep.subr.mxu0 0.0
    %791 = vmatpush1.msra.mxu0 %v262
    %792 = vmatprep.subr.mxu0 0.0
    %793 = vmatpush1.msra.mxu0 %v261
    %794 = vmatprep.subr.mxu0 0.0
    %795 = vmatpush2.msra.mxu0 0.0
    %796 = vmatprep.subr.mxu0 0.0
    %797 = vmatpush2.msra.mxu0 0.0
    %798 = vmatprep.subr.mxu0 0.0
    %799 = vmatpush2.msra.mxu0 0.0
    %800 = vmatprep.subr.mxu0 0.0
    %801 = vmatpush2.msra.mxu0 0.0
    %802 = vmatprep.subr.mxu0 0.0
    %803 = vmatpush2.msra.mxu0 0.0
    %804 = vmatprep.subr.mxu0 0.0
    %805 = vmatpush2.msra.mxu0 0.0
    %806 = vmatprep.subr.mxu0 0.0
    %807 = vmatpush2.msra.mxu0 0.0
    %808 = vmatprep.subr.mxu0 0.0
    %809 = vmatpush2.msra.mxu0 0.0
    %810 = vmatprep.subr.mxu0 0.0
    %811 = vmatpush2.msra.mxu0 0.0
    %812 = vmatprep.subr.mxu0 0.0
    %813 = vmatpush2.msra.mxu0 0.0
    %814 = vmatprep.subr.mxu0 0.0
    %815 = vmatpush2.msra.mxu0 0.0
    %816 = vmatprep.subr.mxu0 0.0
    %817 = vmatpush2.msra.mxu0 0.0
    %818 = vmatprep.subr.mxu0 0.0
    %819 = vmatpush2.msra.mxu0 0.0
    %820 = vmatprep.subr.mxu0 0.0
    %821 = vmatpush2.msra.mxu0 0.0
    %822 = vmatprep.subr.mxu0 0.0
    %823 = vmatpush2.msra.mxu0 0.0
    %824 = vmatprep.subr.mxu0 0.0
    %825 = vmatpush2.msra.mxu0 0.0
    %826 = vmatprep.mubr.f32.mxu0 0.0
    %827 = vmatmul.mubr.f32.gmra.mxu0 %v760
    %v828 = vpop.f32.mrf.mxu0
    %v829 = vadd.f32 0.0, %v828
    %v830 = vpop.f32.mrf.mxu0
    %831 = vdwg.mxu0
    %v832 = vadd.f32 %v759, %v829
    %v833 = vxor.u32 %v757, 2147483648
    %v834 = vmul.f32 %v833, 1.442695
    %v835 = vpow.pop %v834
    %v836 = vadd.f32 %v835, 1.0
    %v837 = vrcp.pop %v836
    %v838 = vmul.f32 1.0, %v837
    %v839 = vtanh.pop %v757
    %v840 = vmul.f32 %v838, %v640
    %842 = vrot.lane.b32.xlu0 %v839, 64
    %v843 = vpop.permute.xlu0 %842
    %v845 = vmul.f32 %v838, %v843
    %847 = vrot.lane.b32.xlu0 %v845, 32
    %v848 = vpop.permute.xlu0 %847
    %v850 = vadd.f32 %v840, %v848
    %v851 = vtanh.pop %v850
    %853 = vrot.lane.b32.xlu0 %v851, 64
    %v854 = vpop.permute.xlu0 %853
    %v856 = vmul.f32 %v838, %v854
    %v857 = vxor.u32 %v832, 2147483648
    %v858 = vmul.f32 %v857, 1.442695
    %v859 = vpow.pop %v858
    %v860 = vadd.f32 %v859, 1.0
    %v861 = vrcp.pop %v860
    %v862 = vmul.f32 1.0, %v861
    %v863 = vtanh.pop %v832
    %v864 = vmul.f32 %v862, %v664
    %866 = vrot.lane.b32.xlu0 %v863, 64
    %v867 = vpop.permute.xlu0 %866
    %v869 = vmul.f32 %v862, %v867
    %871 = vrot.lane.b32.xlu0 %v869, 32
    %v872 = vpop.permute.xlu0 %871
    %v874 = vadd.f32 %v864, %v872
    %v875 = vtanh.pop %v874
    %877 = vrot.lane.b32.xlu0 %v875, 64
    %v878 = vpop.permute.xlu0 %877
    %v880 = vmul.f32 %v862, %v878
    %882 = vrot.lane.b32.xlu0 %v856, 32
    %v883 = vpop.permute.xlu0 %882
    %s885 = scalar_lea.vmem [#allocation12], 16
    %886 = vst.msk [vmem:[%s885] sm:$0xff] %vm266, %v883
    %888 = vrot.lane.b32.xlu0 %v880, 32
    %v889 = vpop.permute.xlu0 %888
    %s891 = scalar_lea.vmem [#allocation13], 40
    %892 = vst.msk [vmem:[%s891] sm:$0xff] %vm266, %v889
    %s893 = scalar_lea.vmem [#allocation2], 24
    %v894 = vld [vmem:[%s893] sm:$0xff]
    %v895 = vsel %vm266, %v883, 0
    %897 = vmatprep.subr.mxu0 0.0
    %898 = vmatpush1.msra.mxu0 0.0
    %899 = vmatprep.subr.mxu0 0.0
    %900 = vmatpush1.msra.mxu0 0.0
    %901 = vmatprep.subr.mxu0 0.0
    %902 = vmatpush1.msra.mxu0 0.0
    %903 = vmatprep.subr.mxu0 0.0
    %904 = vmatpush1.msra.mxu0 0.0
    %905 = vmatprep.subr.mxu0 0.0
    %906 = vmatpush1.msra.mxu0 0.0
    %907 = vmatprep.subr.mxu0 0.0
    %908 = vmatpush1.msra.mxu0 0.0
    %909 = vmatprep.subr.mxu0 0.0
    %910 = vmatpush1.msra.mxu0 0.0
    %911 = vmatprep.subr.mxu0 0.0
    %912 = vmatpush1.msra.mxu0 0.0
    %913 = vmatprep.subr.mxu0 0.0
    %914 = vmatpush1.msra.mxu0 0.0
    %915 = vmatprep.subr.mxu0 0.0
    %916 = vmatpush1.msra.mxu0 0.0
    %917 = vmatprep.subr.mxu0 0.0
    %918 = vmatpush1.msra.mxu0 0.0
    %919 = vmatprep.subr.mxu0 0.0
    %920 = vmatpush1.msra.mxu0 0.0
    %921 = vmatprep.subr.mxu0 0.0
    %922 = vmatpush1.msra.mxu0 %v260
    %923 = vmatprep.subr.mxu0 0.0
    %924 = vmatpush1.msra.mxu0 %v259
    %925 = vmatprep.subr.mxu0 0.0
    %926 = vmatpush1.msra.mxu0 %v258
    %927 = vmatprep.subr.mxu0 0.0
    %928 = vmatpush1.msra.mxu0 %v257
    %929 = vmatprep.subr.mxu0 0.0
    %930 = vmatpush2.msra.mxu0 0.0
    %931 = vmatprep.subr.mxu0 0.0
    %932 = vmatpush2.msra.mxu0 0.0
    %933 = vmatprep.subr.mxu0 0.0
    %934 = vmatpush2.msra.mxu0 0.0
    %935 = vmatprep.subr.mxu0 0.0
    %936 = vmatpush2.msra.mxu0 0.0
    %937 = vmatprep.subr.mxu0 0.0
    %938 = vmatpush2.msra.mxu0 0.0
    %939 = vmatprep.subr.mxu0 0.0
    %940 = vmatpush2.msra.mxu0 0.0
    %941 = vmatprep.subr.mxu0 0.0
    %942 = vmatpush2.msra.mxu0 0.0
    %943 = vmatprep.subr.mxu0 0.0
    %944 = vmatpush2.msra.mxu0 0.0
    %945 = vmatprep.subr.mxu0 0.0
    %946 = vmatpush2.msra.mxu0 0.0
    %947 = vmatprep.subr.mxu0 0.0
    %948 = vmatpush2.msra.mxu0 0.0
    %949 = vmatprep.subr.mxu0 0.0
    %950 = vmatpush2.msra.mxu0 0.0
    %951 = vmatprep.subr.mxu0 0.0
    %952 = vmatpush2.msra.mxu0 0.0
    %953 = vmatprep.subr.mxu0 0.0
    %954 = vmatpush2.msra.mxu0 0.0
    %955 = vmatprep.subr.mxu0 0.0
    %956 = vmatpush2.msra.mxu0 0.0
    %957 = vmatprep.subr.mxu0 0.0
    %958 = vmatpush2.msra.mxu0 0.0
    %959 = vmatprep.subr.mxu0 0.0
    %960 = vmatpush2.msra.mxu0 0.0
    %961 = vmatprep.mubr.f32.mxu0 0.0
    %962 = vmatmul.mubr.f32.gmra.mxu0 %v895
    %v963 = vpop.f32.mrf.mxu0
    %v964 = vadd.f32 0.0, %v963
    %v965 = vpop.f32.mrf.mxu0
    %966 = vdwg.mxu0
    %v967 = vadd.f32 %v894, %v964
    %s968 = scalar_lea.vmem [#allocation3], 32
    %v969 = vld [vmem:[%s968] sm:$0xff]
    %v970 = vsel %vm266, %v889, 0
    %972 = vmatprep.subr.mxu0 0.0
    %973 = vmatpush1.msra.mxu0 0.0
    %974 = vmatprep.subr.mxu0 0.0
    %975 = vmatpush1.msra.mxu0 0.0
    %976 = vmatprep.subr.mxu0 0.0
    %977 = vmatpush1.msra.mxu0 0.0
    %978 = vmatprep.subr.mxu0 0.0
    %979 = vmatpush1.msra.mxu0 0.0
    %980 = vmatprep.subr.mxu0 0.0
    %981 = vmatpush1.msra.mxu0 0.0
    %982 = vmatprep.subr.mxu0 0.0
    %983 = vmatpush1.msra.mxu0 0.0
    %984 = vmatprep.subr.mxu0 0.0
    %985 = vmatpush1.msra.mxu0 0.0
    %986 = vmatprep.subr.mxu0 0.0
    %987 = vmatpush1.msra.mxu0 0.0
    %988 = vmatprep.subr.mxu0 0.0
    %989 = vmatpush1.msra.mxu0 0.0
    %990 = vmatprep.subr.mxu0 0.0
    %991 = vmatpush1.msra.mxu0 0.0
    %992 = vmatprep.subr.mxu0 0.0
    %993 = vmatpush1.msra.mxu0 0.0
    %994 = vmatprep.subr.mxu0 0.0
    %995 = vmatpush1.msra.mxu0 0.0
    %996 = vmatprep.subr.mxu0 0.0
    %997 = vmatpush1.msra.mxu0 %v264
    %998 = vmatprep.subr.mxu0 0.0
    %999 = vmatpush1.msra.mxu0 %v263
    %1000 = vmatprep.subr.mxu0 0.0
    %1001 = vmatpush1.msra.mxu0 %v262
    %1002 = vmatprep.subr.mxu0 0.0
    %1003 = vmatpush1.msra.mxu0 %v261
    %1004 = vmatprep.subr.mxu0 0.0
    %1005 = vmatpush2.msra.mxu0 0.0
    %1006 = vmatprep.subr.mxu0 0.0
    %1007 = vmatpush2.msra.mxu0 0.0
    %1008 = vmatprep.subr.mxu0 0.0
    %1009 = vmatpush2.msra.mxu0 0.0
    %1010 = vmatprep.subr.mxu0 0.0
    %1011 = vmatpush2.msra.mxu0 0.0
    %1012 = vmatprep.subr.mxu0 0.0
    %1013 = vmatpush2.msra.mxu0 0.0
    %1014 = vmatprep.subr.mxu0 0.0
    %1015 = vmatpush2.msra.mxu0 0.0
    %1016 = vmatprep.subr.mxu0 0.0
    %1017 = vmatpush2.msra.mxu0 0.0
    %1018 = vmatprep.subr.mxu0 0.0
    %1019 = vmatpush2.msra.mxu0 0.0
    %1020 = vmatprep.subr.mxu0 0.0
    %1021 = vmatpush2.msra.mxu0 0.0
    %1022 = vmatprep.subr.mxu0 0.0
    %1023 = vmatpush2.msra.mxu0 0.0
    %1024 = vmatprep.subr.mxu0 0.0
    %1025 = vmatpush2.msra.mxu0 0.0
    %1026 = vmatprep.subr.mxu0 0.0
    %1027 = vmatpush2.msra.mxu0 0.0
    %1028 = vmatprep.subr.mxu0 0.0
    %1029 = vmatpush2.msra.mxu0 0.0
    %1030 = vmatprep.subr.mxu0 0.0
    %1031 = vmatpush2.msra.mxu0 0.0
    %1032 = vmatprep.subr.mxu0 0.0
    %1033 = vmatpush2.msra.mxu0 0.0
    %1034 = vmatprep.subr.mxu0 0.0
    %1035 = vmatpush2.msra.mxu0 0.0
    %1036 = vmatprep.mubr.f32.mxu0 0.0
    %1037 = vmatmul.mubr.f32.gmra.mxu0 %v970
    %v1038 = vpop.f32.mrf.mxu0
    %v1039 = vadd.f32 0.0, %v1038
    %v1040 = vpop.f32.mrf.mxu0
    %1041 = vdwg.mxu0
    %v1042 = vadd.f32 %v969, %v1039
    %v1043 = vxor.u32 %v967, 2147483648
    %v1044 = vmul.f32 %v1043, 1.442695
    %v1045 = vpow.pop %v1044
    %v1046 = vadd.f32 %v1045, 1.0
    %v1047 = vrcp.pop %v1046
    %v1048 = vmul.f32 1.0, %v1047
    %v1049 = vtanh.pop %v967
    %v1050 = vmul.f32 %v1048, %v850
    %1052 = vrot.lane.b32.xlu0 %v1049, 64
    %v1053 = vpop.permute.xlu0 %1052
    %v1055 = vmul.f32 %v1048, %v1053
    %1057 = vrot.lane.b32.xlu0 %v1055, 32
    %v1058 = vpop.permute.xlu0 %1057
    %v1060 = vadd.f32 %v1050, %v1058
    %v1061 = vtanh.pop %v1060
    %1063 = vrot.lane.b32.xlu0 %v1061, 64
    %v1064 = vpop.permute.xlu0 %1063
    %v1066 = vmul.f32 %v1048, %v1064
    %v1067 = vxor.u32 %v1042, 2147483648
    %v1068 = vmul.f32 %v1067, 1.442695
    %v1069 = vpow.pop %v1068
    %v1070 = vadd.f32 %v1069, 1.0
    %v1071 = vrcp.pop %v1070
    %v1072 = vmul.f32 1.0, %v1071
    %v1073 = vtanh.pop %v1042
    %v1074 = vmul.f32 %v1072, %v874
    %1076 = vrot.lane.b32.xlu0 %v1073, 64
    %v1077 = vpop.permute.xlu0 %1076
    %v1079 = vmul.f32 %v1072, %v1077
    %1081 = vrot.lane.b32.xlu0 %v1079, 32
    %v1082 = vpop.permute.xlu0 %1081
    %v1084 = vadd.f32 %v1074, %v1082
    %v1085 = vtanh.pop %v1084
    %1087 = vrot.lane.b32.xlu0 %v1085, 64
    %v1088 = vpop.permute.xlu0 %1087
    %v1090 = vmul.f32 %v1072, %v1088
    %1092 = vrot.lane.b32.xlu0 %v1066, 32
    %v1093 = vpop.permute.xlu0 %1092
    %s1095 = scalar_lea.vmem [#allocation12], 24
    %1096 = vst.msk [vmem:[%s1095] sm:$0xff] %vm266, %v1093
    %1098 = vrot.lane.b32.xlu0 %v1090, 32
    %v1099 = vpop.permute.xlu0 %1098
    %s1101 = scalar_lea.vmem [#allocation13], 32
    %1102 = vst.msk [vmem:[%s1101] sm:$0xff] %vm266, %v1099
    %s1103 = scalar_lea.vmem [#allocation2], 32
    %v1104 = vld [vmem:[%s1103] sm:$0xff]
    %v1105 = vsel %vm266, %v1093, 0
    %1107 = vmatprep.subr.mxu0 0.0
    %1108 = vmatpush1.msra.mxu0 0.0
    %1109 = vmatprep.subr.mxu0 0.0
    %1110 = vmatpush1.msra.mxu0 0.0
    %1111 = vmatprep.subr.mxu0 0.0
    %1112 = vmatpush1.msra.mxu0 0.0
    %1113 = vmatprep.subr.mxu0 0.0
    %1114 = vmatpush1.msra.mxu0 0.0
    %1115 = vmatprep.subr.mxu0 0.0
    %1116 = vmatpush1.msra.mxu0 0.0
    %1117 = vmatprep.subr.mxu0 0.0
    %1118 = vmatpush1.msra.mxu0 0.0
    %1119 = vmatprep.subr.mxu0 0.0
    %1120 = vmatpush1.msra.mxu0 0.0
    %1121 = vmatprep.subr.mxu0 0.0
    %1122 = vmatpush1.msra.mxu0 0.0
    %1123 = vmatprep.subr.mxu0 0.0
    %1124 = vmatpush1.msra.mxu0 0.0
    %1125 = vmatprep.subr.mxu0 0.0
    %1126 = vmatpush1.msra.mxu0 0.0
    %1127 = vmatprep.subr.mxu0 0.0
    %1128 = vmatpush1.msra.mxu0 0.0
    %1129 = vmatprep.subr.mxu0 0.0
    %1130 = vmatpush1.msra.mxu0 0.0
    %1131 = vmatprep.subr.mxu0 0.0
    %1132 = vmatpush1.msra.mxu0 %v260
    %1133 = vmatprep.subr.mxu0 0.0
    %1134 = vmatpush1.msra.mxu0 %v259
    %1135 = vmatprep.subr.mxu0 0.0
    %1136 = vmatpush1.msra.mxu0 %v258
    %1137 = vmatprep.subr.mxu0 0.0
    %1138 = vmatpush1.msra.mxu0 %v257
    %1139 = vmatprep.subr.mxu0 0.0
    %1140 = vmatpush2.msra.mxu0 0.0
    %1141 = vmatprep.subr.mxu0 0.0
    %1142 = vmatpush2.msra.mxu0 0.0
    %1143 = vmatprep.subr.mxu0 0.0
    %1144 = vmatpush2.msra.mxu0 0.0
    %1145 = vmatprep.subr.mxu0 0.0
    %1146 = vmatpush2.msra.mxu0 0.0
    %1147 = vmatprep.subr.mxu0 0.0
    %1148 = vmatpush2.msra.mxu0 0.0
    %1149 = vmatprep.subr.mxu0 0.0
    %1150 = vmatpush2.msra.mxu0 0.0
    %1151 = vmatprep.subr.mxu0 0.0
    %1152 = vmatpush2.msra.mxu0 0.0
    %1153 = vmatprep.subr.mxu0 0.0
    %1154 = vmatpush2.msra.mxu0 0.0
    %1155 = vmatprep.subr.mxu0 0.0
    %1156 = vmatpush2.msra.mxu0 0.0
    %1157 = vmatprep.subr.mxu0 0.0
    %1158 = vmatpush2.msra.mxu0 0.0
    %1159 = vmatprep.subr.mxu0 0.0
    %1160 = vmatpush2.msra.mxu0 0.0
    %1161 = vmatprep.subr.mxu0 0.0
    %1162 = vmatpush2.msra.mxu0 0.0
    %1163 = vmatprep.subr.mxu0 0.0
    %1164 = vmatpush2.msra.mxu0 0.0
    %1165 = vmatprep.subr.mxu0 0.0
    %1166 = vmatpush2.msra.mxu0 0.0
    %1167 = vmatprep.subr.mxu0 0.0
    %1168 = vmatpush2.msra.mxu0 0.0
    %1169 = vmatprep.subr.mxu0 0.0
    %1170 = vmatpush2.msra.mxu0 0.0
    %1171 = vmatprep.mubr.f32.mxu0 0.0
    %1172 = vmatmul.mubr.f32.gmra.mxu0 %v1105
    %v1173 = vpop.f32.mrf.mxu0
    %v1174 = vadd.f32 0.0, %v1173
    %v1175 = vpop.f32.mrf.mxu0
    %1176 = vdwg.mxu0
    %v1177 = vadd.f32 %v1104, %v1174
    %s1178 = scalar_lea.vmem [#allocation3], 24
    %v1179 = vld [vmem:[%s1178] sm:$0xff]
    %v1180 = vsel %vm266, %v1099, 0
    %1182 = vmatprep.subr.mxu0 0.0
    %1183 = vmatpush1.msra.mxu0 0.0
    %1184 = vmatprep.subr.mxu0 0.0
    %1185 = vmatpush1.msra.mxu0 0.0
    %1186 = vmatprep.subr.mxu0 0.0
    %1187 = vmatpush1.msra.mxu0 0.0
    %1188 = vmatprep.subr.mxu0 0.0
    %1189 = vmatpush1.msra.mxu0 0.0
    %1190 = vmatprep.subr.mxu0 0.0
    %1191 = vmatpush1.msra.mxu0 0.0
    %1192 = vmatprep.subr.mxu0 0.0
    %1193 = vmatpush1.msra.mxu0 0.0
    %1194 = vmatprep.subr.mxu0 0.0
    %1195 = vmatpush1.msra.mxu0 0.0
    %1196 = vmatprep.subr.mxu0 0.0
    %1197 = vmatpush1.msra.mxu0 0.0
    %1198 = vmatprep.subr.mxu0 0.0
    %1199 = vmatpush1.msra.mxu0 0.0
    %1200 = vmatprep.subr.mxu0 0.0
    %1201 = vmatpush1.msra.mxu0 0.0
    %1202 = vmatprep.subr.mxu0 0.0
    %1203 = vmatpush1.msra.mxu0 0.0
    %1204 = vmatprep.subr.mxu0 0.0
    %1205 = vmatpush1.msra.mxu0 0.0
    %1206 = vmatprep.subr.mxu0 0.0
    %1207 = vmatpush1.msra.mxu0 %v264
    %1208 = vmatprep.subr.mxu0 0.0
    %1209 = vmatpush1.msra.mxu0 %v263
    %1210 = vmatprep.subr.mxu0 0.0
    %1211 = vmatpush1.msra.mxu0 %v262
    %1212 = vmatprep.subr.mxu0 0.0
    %1213 = vmatpush1.msra.mxu0 %v261
    %1214 = vmatprep.subr.mxu0 0.0
    %1215 = vmatpush2.msra.mxu0 0.0
    %1216 = vmatprep.subr.mxu0 0.0
    %1217 = vmatpush2.msra.mxu0 0.0
    %1218 = vmatprep.subr.mxu0 0.0
    %1219 = vmatpush2.msra.mxu0 0.0
    %1220 = vmatprep.subr.mxu0 0.0
    %1221 = vmatpush2.msra.mxu0 0.0
    %1222 = vmatprep.subr.mxu0 0.0
    %1223 = vmatpush2.msra.mxu0 0.0
    %1224 = vmatprep.subr.mxu0 0.0
    %1225 = vmatpush2.msra.mxu0 0.0
    %1226 = vmatprep.subr.mxu0 0.0
    %1227 = vmatpush2.msra.mxu0 0.0
    %1228 = vmatprep.subr.mxu0 0.0
    %1229 = vmatpush2.msra.mxu0 0.0
    %1230 = vmatprep.subr.mxu0 0.0
    %1231 = vmatpush2.msra.mxu0 0.0
    %1232 = vmatprep.subr.mxu0 0.0
    %1233 = vmatpush2.msra.mxu0 0.0
    %1234 = vmatprep.subr.mxu0 0.0
    %1235 = vmatpush2.msra.mxu0 0.0
    %1236 = vmatprep.subr.mxu0 0.0
    %1237 = vmatpush2.msra.mxu0 0.0
    %1238 = vmatprep.subr.mxu0 0.0
    %1239 = vmatpush2.msra.mxu0 0.0
    %1240 = vmatprep.subr.mxu0 0.0
    %1241 = vmatpush2.msra.mxu0 0.0
    %1242 = vmatprep.subr.mxu0 0.0
    %1243 = vmatpush2.msra.mxu0 0.0
    %1244 = vmatprep.subr.mxu0 0.0
    %1245 = vmatpush2.msra.mxu0 0.0
    %1246 = vmatprep.mubr.f32.mxu0 0.0
    %1247 = vmatmul.mubr.f32.gmra.mxu0 %v1180
    %v1248 = vpop.f32.mrf.mxu0
    %v1249 = vadd.f32 0.0, %v1248
    %v1250 = vpop.f32.mrf.mxu0
    %1251 = vdwg.mxu0
    %v1252 = vadd.f32 %v1179, %v1249
    %v1253 = vxor.u32 %v1177, 2147483648
    %v1254 = vmul.f32 %v1253, 1.442695
    %v1255 = vpow.pop %v1254
    %v1256 = vadd.f32 %v1255, 1.0
    %v1257 = vrcp.pop %v1256
    %v1258 = vmul.f32 1.0, %v1257
    %v1259 = vtanh.pop %v1177
    %v1260 = vmul.f32 %v1258, %v1060
    %1262 = vrot.lane.b32.xlu0 %v1259, 64
    %v1263 = vpop.permute.xlu0 %1262
    %v1265 = vmul.f32 %v1258, %v1263
    %1267 = vrot.lane.b32.xlu0 %v1265, 32
    %v1268 = vpop.permute.xlu0 %1267
    %v1270 = vadd.f32 %v1260, %v1268
    %v1271 = vtanh.pop %v1270
    %1273 = vrot.lane.b32.xlu0 %v1271, 64
    %v1274 = vpop.permute.xlu0 %1273
    %v1276 = vmul.f32 %v1258, %v1274
    %v1277 = vxor.u32 %v1252, 2147483648
    %v1278 = vmul.f32 %v1277, 1.442695
    %v1279 = vpow.pop %v1278
    %v1280 = vadd.f32 %v1279, 1.0
    %v1281 = vrcp.pop %v1280
    %v1282 = vmul.f32 1.0, %v1281
    %v1283 = vtanh.pop %v1252
    %v1284 = vmul.f32 %v1282, %v1084
    %1286 = vrot.lane.b32.xlu0 %v1283, 64
    %v1287 = vpop.permute.xlu0 %1286
    %v1289 = vmul.f32 %v1282, %v1287
    %1291 = vrot.lane.b32.xlu0 %v1289, 32
    %v1292 = vpop.permute.xlu0 %1291
    %v1294 = vadd.f32 %v1284, %v1292
    %v1295 = vtanh.pop %v1294
    %1297 = vrot.lane.b32.xlu0 %v1295, 64
    %v1298 = vpop.permute.xlu0 %1297
    %v1300 = vmul.f32 %v1282, %v1298
    %1302 = vrot.lane.b32.xlu0 %v1276, 32
    %v1303 = vpop.permute.xlu0 %1302
    %s1305 = scalar_lea.vmem [#allocation12], 32
    %1306 = vst.msk [vmem:[%s1305] sm:$0xff] %vm266, %v1303
    %1308 = vrot.lane.b32.xlu0 %v1300, 32
    %v1309 = vpop.permute.xlu0 %1308
    %s1311 = scalar_lea.vmem [#allocation13], 24
    %1312 = vst.msk [vmem:[%s1311] sm:$0xff] %vm266, %v1309
    %s1313 = scalar_lea.vmem [#allocation2], 40
    %v1314 = vld [vmem:[%s1313] sm:$0xff]
    %v1315 = vsel %vm266, %v1303, 0
    %1317 = vmatprep.subr.mxu0 0.0
    %1318 = vmatpush1.msra.mxu0 0.0
    %1319 = vmatprep.subr.mxu0 0.0
    %1320 = vmatpush1.msra.mxu0 0.0
    %1321 = vmatprep.subr.mxu0 0.0
    %1322 = vmatpush1.msra.mxu0 0.0
    %1323 = vmatprep.subr.mxu0 0.0
    %1324 = vmatpush1.msra.mxu0 0.0
    %1325 = vmatprep.subr.mxu0 0.0
    %1326 = vmatpush1.msra.mxu0 0.0
    %1327 = vmatprep.subr.mxu0 0.0
    %1328 = vmatpush1.msra.mxu0 0.0
    %1329 = vmatprep.subr.mxu0 0.0
    %1330 = vmatpush1.msra.mxu0 0.0
    %1331 = vmatprep.subr.mxu0 0.0
    %1332 = vmatpush1.msra.mxu0 0.0
    %1333 = vmatprep.subr.mxu0 0.0
    %1334 = vmatpush1.msra.mxu0 0.0
    %1335 = vmatprep.subr.mxu0 0.0
    %1336 = vmatpush1.msra.mxu0 0.0
    %1337 = vmatprep.subr.mxu0 0.0
    %1338 = vmatpush1.msra.mxu0 0.0
    %1339 = vmatprep.subr.mxu0 0.0
    %1340 = vmatpush1.msra.mxu0 0.0
    %1341 = vmatprep.subr.mxu0 0.0
    %1342 = vmatpush1.msra.mxu0 %v260
    %1343 = vmatprep.subr.mxu0 0.0
    %1344 = vmatpush1.msra.mxu0 %v259
    %1345 = vmatprep.subr.mxu0 0.0
    %1346 = vmatpush1.msra.mxu0 %v258
    %1347 = vmatprep.subr.mxu0 0.0
    %1348 = vmatpush1.msra.mxu0 %v257
    %1349 = vmatprep.subr.mxu0 0.0
    %1350 = vmatpush2.msra.mxu0 0.0
    %1351 = vmatprep.subr.mxu0 0.0
    %1352 = vmatpush2.msra.mxu0 0.0
    %1353 = vmatprep.subr.mxu0 0.0
    %1354 = vmatpush2.msra.mxu0 0.0
    %1355 = vmatprep.subr.mxu0 0.0
    %1356 = vmatpush2.msra.mxu0 0.0
    %1357 = vmatprep.subr.mxu0 0.0
    %1358 = vmatpush2.msra.mxu0 0.0
    %1359 = vmatprep.subr.mxu0 0.0
    %1360 = vmatpush2.msra.mxu0 0.0
    %1361 = vmatprep.subr.mxu0 0.0
    %1362 = vmatpush2.msra.mxu0 0.0
    %1363 = vmatprep.subr.mxu0 0.0
    %1364 = vmatpush2.msra.mxu0 0.0
    %1365 = vmatprep.subr.mxu0 0.0
    %1366 = vmatpush2.msra.mxu0 0.0
    %1367 = vmatprep.subr.mxu0 0.0
    %1368 = vmatpush2.msra.mxu0 0.0
    %1369 = vmatprep.subr.mxu0 0.0
    %1370 = vmatpush2.msra.mxu0 0.0
    %1371 = vmatprep.subr.mxu0 0.0
    %1372 = vmatpush2.msra.mxu0 0.0
    %1373 = vmatprep.subr.mxu0 0.0
    %1374 = vmatpush2.msra.mxu0 0.0
    %1375 = vmatprep.subr.mxu0 0.0
    %1376 = vmatpush2.msra.mxu0 0.0
    %1377 = vmatprep.subr.mxu0 0.0
    %1378 = vmatpush2.msra.mxu0 0.0
    %1379 = vmatprep.subr.mxu0 0.0
    %1380 = vmatpush2.msra.mxu0 0.0
    %1381 = vmatprep.mubr.f32.mxu0 0.0
    %1382 = vmatmul.mubr.f32.gmra.mxu0 %v1315
    %v1383 = vpop.f32.mrf.mxu0
    %v1384 = vadd.f32 0.0, %v1383
    %v1385 = vpop.f32.mrf.mxu0
    %1386 = vdwg.mxu0
    %v1387 = vadd.f32 %v1314, %v1384
    %s1388 = scalar_lea.vmem [#allocation3], 16
    %v1389 = vld [vmem:[%s1388] sm:$0xff]
    %v1390 = vsel %vm266, %v1309, 0
    %1392 = vmatprep.subr.mxu0 0.0
    %1393 = vmatpush1.msra.mxu0 0.0
    %1394 = vmatprep.subr.mxu0 0.0
    %1395 = vmatpush1.msra.mxu0 0.0
    %1396 = vmatprep.subr.mxu0 0.0
    %1397 = vmatpush1.msra.mxu0 0.0
    %1398 = vmatprep.subr.mxu0 0.0
    %1399 = vmatpush1.msra.mxu0 0.0
    %1400 = vmatprep.subr.mxu0 0.0
    %1401 = vmatpush1.msra.mxu0 0.0
    %1402 = vmatprep.subr.mxu0 0.0
    %1403 = vmatpush1.msra.mxu0 0.0
    %1404 = vmatprep.subr.mxu0 0.0
    %1405 = vmatpush1.msra.mxu0 0.0
    %1406 = vmatprep.subr.mxu0 0.0
    %1407 = vmatpush1.msra.mxu0 0.0
    %1408 = vmatprep.subr.mxu0 0.0
    %1409 = vmatpush1.msra.mxu0 0.0
    %1410 = vmatprep.subr.mxu0 0.0
    %1411 = vmatpush1.msra.mxu0 0.0
    %1412 = vmatprep.subr.mxu0 0.0
    %1413 = vmatpush1.msra.mxu0 0.0
    %1414 = vmatprep.subr.mxu0 0.0
    %1415 = vmatpush1.msra.mxu0 0.0
    %1416 = vmatprep.subr.mxu0 0.0
    %1417 = vmatpush1.msra.mxu0 %v264
    %1418 = vmatprep.subr.mxu0 0.0
    %1419 = vmatpush1.msra.mxu0 %v263
    %1420 = vmatprep.subr.mxu0 0.0
    %1421 = vmatpush1.msra.mxu0 %v262
    %1422 = vmatprep.subr.mxu0 0.0
    %1423 = vmatpush1.msra.mxu0 %v261
    %1424 = vmatprep.subr.mxu0 0.0
    %1425 = vmatpush2.msra.mxu0 0.0
    %1426 = vmatprep.subr.mxu0 0.0
    %1427 = vmatpush2.msra.mxu0 0.0
    %1428 = vmatprep.subr.mxu0 0.0
    %1429 = vmatpush2.msra.mxu0 0.0
    %1430 = vmatprep.subr.mxu0 0.0
    %1431 = vmatpush2.msra.mxu0 0.0
    %1432 = vmatprep.subr.mxu0 0.0
    %1433 = vmatpush2.msra.mxu0 0.0
    %1434 = vmatprep.subr.mxu0 0.0
    %1435 = vmatpush2.msra.mxu0 0.0
    %1436 = vmatprep.subr.mxu0 0.0
    %1437 = vmatpush2.msra.mxu0 0.0
    %1438 = vmatprep.subr.mxu0 0.0
    %1439 = vmatpush2.msra.mxu0 0.0
    %1440 = vmatprep.subr.mxu0 0.0
    %1441 = vmatpush2.msra.mxu0 0.0
    %1442 = vmatprep.subr.mxu0 0.0
    %1443 = vmatpush2.msra.mxu0 0.0
    %1444 = vmatprep.subr.mxu0 0.0
    %1445 = vmatpush2.msra.mxu0 0.0
    %1446 = vmatprep.subr.mxu0 0.0
    %1447 = vmatpush2.msra.mxu0 0.0
    %1448 = vmatprep.subr.mxu0 0.0
    %1449 = vmatpush2.msra.mxu0 0.0
    %1450 = vmatprep.subr.mxu0 0.0
    %1451 = vmatpush2.msra.mxu0 0.0
    %1452 = vmatprep.subr.mxu0 0.0
    %1453 = vmatpush2.msra.mxu0 0.0
    %1454 = vmatprep.subr.mxu0 0.0
    %1455 = vmatpush2.msra.mxu0 0.0
    %1456 = vmatprep.mubr.f32.mxu0 0.0
    %1457 = vmatmul.mubr.f32.gmra.mxu0 %v1390
    %v1458 = vpop.f32.mrf.mxu0
    %v1459 = vadd.f32 0.0, %v1458
    %v1460 = vpop.f32.mrf.mxu0
    %1461 = vdwg.mxu0
    %v1462 = vadd.f32 %v1389, %v1459
    %v1463 = vxor.u32 %v1387, 2147483648
    %v1464 = vmul.f32 %v1463, 1.442695
    %v1465 = vpow.pop %v1464
    %v1466 = vadd.f32 %v1465, 1.0
    %v1467 = vrcp.pop %v1466
    %v1468 = vmul.f32 1.0, %v1467
    %v1469 = vtanh.pop %v1387
    %v1470 = vmul.f32 %v1468, %v1270
    %1472 = vrot.lane.b32.xlu0 %v1469, 64
    %v1473 = vpop.permute.xlu0 %1472
    %v1475 = vmul.f32 %v1468, %v1473
    %1477 = vrot.lane.b32.xlu0 %v1475, 32
    %v1478 = vpop.permute.xlu0 %1477
    %v1480 = vadd.f32 %v1470, %v1478
    %v1481 = vtanh.pop %v1480
    %1483 = vrot.lane.b32.xlu0 %v1481, 64
    %v1484 = vpop.permute.xlu0 %1483
    %v1486 = vmul.f32 %v1468, %v1484
    %v1487 = vxor.u32 %v1462, 2147483648
    %v1488 = vmul.f32 %v1487, 1.442695
    %v1489 = vpow.pop %v1488
    %v1490 = vadd.f32 %v1489, 1.0
    %v1491 = vrcp.pop %v1490
    %v1492 = vmul.f32 1.0, %v1491
    %v1493 = vtanh.pop %v1462
    %v1494 = vmul.f32 %v1492, %v1294
    %1496 = vrot.lane.b32.xlu0 %v1493, 64
    %v1497 = vpop.permute.xlu0 %1496
    %v1499 = vmul.f32 %v1492, %v1497
    %1501 = vrot.lane.b32.xlu0 %v1499, 32
    %v1502 = vpop.permute.xlu0 %1501
    %v1504 = vadd.f32 %v1494, %v1502
    %v1505 = vtanh.pop %v1504
    %1507 = vrot.lane.b32.xlu0 %v1505, 64
    %v1508 = vpop.permute.xlu0 %1507
    %v1510 = vmul.f32 %v1492, %v1508
    %1512 = vrot.lane.b32.xlu0 %v1486, 32
    %v1513 = vpop.permute.xlu0 %1512
    %s1515 = scalar_lea.vmem [#allocation12], 40
    %1516 = vst.msk [vmem:[%s1515] sm:$0xff] %vm266, %v1513
    %1518 = vrot.lane.b32.xlu0 %v1510, 32
    %v1519 = vpop.permute.xlu0 %1518
    %s1521 = scalar_lea.vmem [#allocation13], 16
    %1522 = vst.msk [vmem:[%s1521] sm:$0xff] %vm266, %v1519
    %s1523 = scalar_lea.vmem [#allocation2], 48
    %v1524 = vld [vmem:[%s1523] sm:$0xff]
    %v1525 = vsel %vm266, %v1513, 0
    %1527 = vmatprep.subr.mxu0 0.0
    %1528 = vmatpush1.msra.mxu0 0.0
    %1529 = vmatprep.subr.mxu0 0.0
    %1530 = vmatpush1.msra.mxu0 0.0
    %1531 = vmatprep.subr.mxu0 0.0
    %1532 = vmatpush1.msra.mxu0 0.0
    %1533 = vmatprep.subr.mxu0 0.0
    %1534 = vmatpush1.msra.mxu0 0.0
    %1535 = vmatprep.subr.mxu0 0.0
    %1536 = vmatpush1.msra.mxu0 0.0
    %1537 = vmatprep.subr.mxu0 0.0
    %1538 = vmatpush1.msra.mxu0 0.0
    %1539 = vmatprep.subr.mxu0 0.0
    %1540 = vmatpush1.msra.mxu0 0.0
    %1541 = vmatprep.subr.mxu0 0.0
    %1542 = vmatpush1.msra.mxu0 0.0
    %1543 = vmatprep.subr.mxu0 0.0
    %1544 = vmatpush1.msra.mxu0 0.0
    %1545 = vmatprep.subr.mxu0 0.0
    %1546 = vmatpush1.msra.mxu0 0.0
    %1547 = vmatprep.subr.mxu0 0.0
    %1548 = vmatpush1.msra.mxu0 0.0
    %1549 = vmatprep.subr.mxu0 0.0
    %1550 = vmatpush1.msra.mxu0 0.0
    %1551 = vmatprep.subr.mxu0 0.0
    %1552 = vmatpush1.msra.mxu0 %v260
    %1553 = vmatprep.subr.mxu0 0.0
    %1554 = vmatpush1.msra.mxu0 %v259
    %1555 = vmatprep.subr.mxu0 0.0
    %1556 = vmatpush1.msra.mxu0 %v258
    %1557 = vmatprep.subr.mxu0 0.0
    %1558 = vmatpush1.msra.mxu0 %v257
    %1559 = vmatprep.subr.mxu0 0.0
    %1560 = vmatpush2.msra.mxu0 0.0
    %1561 = vmatprep.subr.mxu0 0.0
    %1562 = vmatpush2.msra.mxu0 0.0
    %1563 = vmatprep.subr.mxu0 0.0
    %1564 = vmatpush2.msra.mxu0 0.0
    %1565 = vmatprep.subr.mxu0 0.0
    %1566 = vmatpush2.msra.mxu0 0.0
    %1567 = vmatprep.subr.mxu0 0.0
    %1568 = vmatpush2.msra.mxu0 0.0
    %1569 = vmatprep.subr.mxu0 0.0
    %1570 = vmatpush2.msra.mxu0 0.0
    %1571 = vmatprep.subr.mxu0 0.0
    %1572 = vmatpush2.msra.mxu0 0.0
    %1573 = vmatprep.subr.mxu0 0.0
    %1574 = vmatpush2.msra.mxu0 0.0
    %1575 = vmatprep.subr.mxu0 0.0
    %1576 = vmatpush2.msra.mxu0 0.0
    %1577 = vmatprep.subr.mxu0 0.0
    %1578 = vmatpush2.msra.mxu0 0.0
    %1579 = vmatprep.subr.mxu0 0.0
    %1580 = vmatpush2.msra.mxu0 0.0
    %1581 = vmatprep.subr.mxu0 0.0
    %1582 = vmatpush2.msra.mxu0 0.0
    %1583 = vmatprep.subr.mxu0 0.0
    %1584 = vmatpush2.msra.mxu0 0.0
    %1585 = vmatprep.subr.mxu0 0.0
    %1586 = vmatpush2.msra.mxu0 0.0
    %1587 = vmatprep.subr.mxu0 0.0
    %1588 = vmatpush2.msra.mxu0 0.0
    %1589 = vmatprep.subr.mxu0 0.0
    %1590 = vmatpush2.msra.mxu0 0.0
    %1591 = vmatprep.mubr.f32.mxu0 0.0
    %1592 = vmatmul.mubr.f32.gmra.mxu0 %v1525
    %v1593 = vpop.f32.mrf.mxu0
    %v1594 = vadd.f32 0.0, %v1593
    %v1595 = vpop.f32.mrf.mxu0
    %1596 = vdwg.mxu0
    %v1597 = vadd.f32 %v1524, %v1594
    %s1598 = scalar_lea.vmem [#allocation3], 8
    %v1599 = vld [vmem:[%s1598] sm:$0xff]
    %v1600 = vsel %vm266, %v1519, 0
    %1602 = vmatprep.subr.mxu0 0.0
    %1603 = vmatpush1.msra.mxu0 0.0
    %1604 = vmatprep.subr.mxu0 0.0
    %1605 = vmatpush1.msra.mxu0 0.0
    %1606 = vmatprep.subr.mxu0 0.0
    %1607 = vmatpush1.msra.mxu0 0.0
    %1608 = vmatprep.subr.mxu0 0.0
    %1609 = vmatpush1.msra.mxu0 0.0
    %1610 = vmatprep.subr.mxu0 0.0
    %1611 = vmatpush1.msra.mxu0 0.0
    %1612 = vmatprep.subr.mxu0 0.0
    %1613 = vmatpush1.msra.mxu0 0.0
    %1614 = vmatprep.subr.mxu0 0.0
    %1615 = vmatpush1.msra.mxu0 0.0
    %1616 = vmatprep.subr.mxu0 0.0
    %1617 = vmatpush1.msra.mxu0 0.0
    %1618 = vmatprep.subr.mxu0 0.0
    %1619 = vmatpush1.msra.mxu0 0.0
    %1620 = vmatprep.subr.mxu0 0.0
    %1621 = vmatpush1.msra.mxu0 0.0
    %1622 = vmatprep.subr.mxu0 0.0
    %1623 = vmatpush1.msra.mxu0 0.0
    %1624 = vmatprep.subr.mxu0 0.0
    %1625 = vmatpush1.msra.mxu0 0.0
    %1626 = vmatprep.subr.mxu0 0.0
    %1627 = vmatpush1.msra.mxu0 %v264
    %1628 = vmatprep.subr.mxu0 0.0
    %1629 = vmatpush1.msra.mxu0 %v263
    %1630 = vmatprep.subr.mxu0 0.0
    %1631 = vmatpush1.msra.mxu0 %v262
    %1632 = vmatprep.subr.mxu0 0.0
    %1633 = vmatpush1.msra.mxu0 %v261
    %1634 = vmatprep.subr.mxu0 0.0
    %1635 = vmatpush2.msra.mxu0 0.0
    %1636 = vmatprep.subr.mxu0 0.0
    %1637 = vmatpush2.msra.mxu0 0.0
    %1638 = vmatprep.subr.mxu0 0.0
    %1639 = vmatpush2.msra.mxu0 0.0
    %1640 = vmatprep.subr.mxu0 0.0
    %1641 = vmatpush2.msra.mxu0 0.0
    %1642 = vmatprep.subr.mxu0 0.0
    %1643 = vmatpush2.msra.mxu0 0.0
    %1644 = vmatprep.subr.mxu0 0.0
    %1645 = vmatpush2.msra.mxu0 0.0
    %1646 = vmatprep.subr.mxu0 0.0
    %1647 = vmatpush2.msra.mxu0 0.0
    %1648 = vmatprep.subr.mxu0 0.0
    %1649 = vmatpush2.msra.mxu0 0.0
    %1650 = vmatprep.subr.mxu0 0.0
    %1651 = vmatpush2.msra.mxu0 0.0
    %1652 = vmatprep.subr.mxu0 0.0
    %1653 = vmatpush2.msra.mxu0 0.0
    %1654 = vmatprep.subr.mxu0 0.0
    %1655 = vmatpush2.msra.mxu0 0.0
    %1656 = vmatprep.subr.mxu0 0.0
    %1657 = vmatpush2.msra.mxu0 0.0
    %1658 = vmatprep.subr.mxu0 0.0
    %1659 = vmatpush2.msra.mxu0 0.0
    %1660 = vmatprep.subr.mxu0 0.0
    %1661 = vmatpush2.msra.mxu0 0.0
    %1662 = vmatprep.subr.mxu0 0.0
    %1663 = vmatpush2.msra.mxu0 0.0
    %1664 = vmatprep.subr.mxu0 0.0
    %1665 = vmatpush2.msra.mxu0 0.0
    %1666 = vmatprep.mubr.f32.mxu0 0.0
    %1667 = vmatmul.mubr.f32.gmra.mxu0 %v1600
    %v1668 = vpop.f32.mrf.mxu0
    %v1669 = vadd.f32 0.0, %v1668
    %v1670 = vpop.f32.mrf.mxu0
    %1671 = vdwg.mxu0
    %v1672 = vadd.f32 %v1599, %v1669
    %v1673 = vxor.u32 %v1597, 2147483648
    %v1674 = vmul.f32 %v1673, 1.442695
    %v1675 = vpow.pop %v1674
    %v1676 = vadd.f32 %v1675, 1.0
    %v1677 = vrcp.pop %v1676
    %v1678 = vmul.f32 1.0, %v1677
    %v1679 = vtanh.pop %v1597
    %v1680 = vmul.f32 %v1678, %v1480
    %1682 = vrot.lane.b32.xlu0 %v1679, 64
    %v1683 = vpop.permute.xlu0 %1682
    %v1685 = vmul.f32 %v1678, %v1683
    %1687 = vrot.lane.b32.xlu0 %v1685, 32
    %v1688 = vpop.permute.xlu0 %1687
    %v1690 = vadd.f32 %v1680, %v1688
    %v1691 = vtanh.pop %v1690
    %1693 = vrot.lane.b32.xlu0 %v1691, 64
    %v1694 = vpop.permute.xlu0 %1693
    %v1696 = vmul.f32 %v1678, %v1694
    %v1697 = vxor.u32 %v1672, 2147483648
    %v1698 = vmul.f32 %v1697, 1.442695
    %v1699 = vpow.pop %v1698
    %v1700 = vadd.f32 %v1699, 1.0
    %v1701 = vrcp.pop %v1700
    %v1702 = vmul.f32 1.0, %v1701
    %v1703 = vtanh.pop %v1672
    %v1704 = vmul.f32 %v1702, %v1504
    %1706 = vrot.lane.b32.xlu0 %v1703, 64
    %v1707 = vpop.permute.xlu0 %1706
    %v1709 = vmul.f32 %v1702, %v1707
    %1711 = vrot.lane.b32.xlu0 %v1709, 32
    %v1712 = vpop.permute.xlu0 %1711
    %v1714 = vadd.f32 %v1704, %v1712
    %v1715 = vtanh.pop %v1714
    %1717 = vrot.lane.b32.xlu0 %v1715, 64
    %v1718 = vpop.permute.xlu0 %1717
    %v1720 = vmul.f32 %v1702, %v1718
    %1722 = vrot.lane.b32.xlu0 %v1696, 32
    %v1723 = vpop.permute.xlu0 %1722
    %s1725 = scalar_lea.vmem [#allocation12], 48
    %1726 = vst.msk [vmem:[%s1725] sm:$0xff] %vm266, %v1723
    %1728 = vrot.lane.b32.xlu0 %v1720, 32
    %v1729 = vpop.permute.xlu0 %1728
    %s1731 = scalar_lea.vmem [#allocation13], 8
    %1732 = vst.msk [vmem:[%s1731] sm:$0xff] %vm266, %v1729
    %s1733 = scalar_lea.vmem [#allocation2], 56
    %v1734 = vld [vmem:[%s1733] sm:$0xff]
    %v1735 = vsel %vm266, %v1723, 0
    %1737 = vmatprep.subr.mxu0 0.0
    %1738 = vmatpush1.msra.mxu0 0.0
    %1739 = vmatprep.subr.mxu0 0.0
    %1740 = vmatpush1.msra.mxu0 0.0
    %1741 = vmatprep.subr.mxu0 0.0
    %1742 = vmatpush1.msra.mxu0 0.0
    %1743 = vmatprep.subr.mxu0 0.0
    %1744 = vmatpush1.msra.mxu0 0.0
    %1745 = vmatprep.subr.mxu0 0.0
    %1746 = vmatpush1.msra.mxu0 0.0
    %1747 = vmatprep.subr.mxu0 0.0
    %1748 = vmatpush1.msra.mxu0 0.0
    %1749 = vmatprep.subr.mxu0 0.0
    %1750 = vmatpush1.msra.mxu0 0.0
    %1751 = vmatprep.subr.mxu0 0.0
    %1752 = vmatpush1.msra.mxu0 0.0
    %1753 = vmatprep.subr.mxu0 0.0
    %1754 = vmatpush1.msra.mxu0 0.0
    %1755 = vmatprep.subr.mxu0 0.0
    %1756 = vmatpush1.msra.mxu0 0.0
    %1757 = vmatprep.subr.mxu0 0.0
    %1758 = vmatpush1.msra.mxu0 0.0
    %1759 = vmatprep.subr.mxu0 0.0
    %1760 = vmatpush1.msra.mxu0 0.0
    %1761 = vmatprep.subr.mxu0 0.0
    %1762 = vmatpush1.msra.mxu0 %v260
    %1763 = vmatprep.subr.mxu0 0.0
    %1764 = vmatpush1.msra.mxu0 %v259
    %1765 = vmatprep.subr.mxu0 0.0
    %1766 = vmatpush1.msra.mxu0 %v258
    %1767 = vmatprep.subr.mxu0 0.0
    %1768 = vmatpush1.msra.mxu0 %v257
    %1769 = vmatprep.subr.mxu0 0.0
    %1770 = vmatpush2.msra.mxu0 0.0
    %1771 = vmatprep.subr.mxu0 0.0
    %1772 = vmatpush2.msra.mxu0 0.0
    %1773 = vmatprep.subr.mxu0 0.0
    %1774 = vmatpush2.msra.mxu0 0.0
    %1775 = vmatprep.subr.mxu0 0.0
    %1776 = vmatpush2.msra.mxu0 0.0
    %1777 = vmatprep.subr.mxu0 0.0
    %1778 = vmatpush2.msra.mxu0 0.0
    %1779 = vmatprep.subr.mxu0 0.0
    %1780 = vmatpush2.msra.mxu0 0.0
    %1781 = vmatprep.subr.mxu0 0.0
    %1782 = vmatpush2.msra.mxu0 0.0
    %1783 = vmatprep.subr.mxu0 0.0
    %1784 = vmatpush2.msra.mxu0 0.0
    %1785 = vmatprep.subr.mxu0 0.0
    %1786 = vmatpush2.msra.mxu0 0.0
    %1787 = vmatprep.subr.mxu0 0.0
    %1788 = vmatpush2.msra.mxu0 0.0
    %1789 = vmatprep.subr.mxu0 0.0
    %1790 = vmatpush2.msra.mxu0 0.0
    %1791 = vmatprep.subr.mxu0 0.0
    %1792 = vmatpush2.msra.mxu0 0.0
    %1793 = vmatprep.subr.mxu0 0.0
    %1794 = vmatpush2.msra.mxu0 0.0
    %1795 = vmatprep.subr.mxu0 0.0
    %1796 = vmatpush2.msra.mxu0 0.0
    %1797 = vmatprep.subr.mxu0 0.0
    %1798 = vmatpush2.msra.mxu0 0.0
    %1799 = vmatprep.subr.mxu0 0.0
    %1800 = vmatpush2.msra.mxu0 0.0
    %1801 = vmatprep.mubr.f32.mxu0 0.0
    %1802 = vmatmul.mubr.f32.gmra.mxu0 %v1735
    %v1803 = vpop.f32.mrf.mxu0
    %v1804 = vadd.f32 0.0, %v1803
    %v1805 = vpop.f32.mrf.mxu0
    %1806 = vdwg.mxu0
    %v1807 = vadd.f32 %v1734, %v1804
    %v1808 = vld [vmem:[#allocation3] sm:$0xff]
    %v1809 = vsel %vm266, %v1729, 0
    %1811 = vmatprep.subr.mxu0 0.0
    %1812 = vmatpush1.msra.mxu0 0.0
    %1813 = vmatprep.subr.mxu0 0.0
    %1814 = vmatpush1.msra.mxu0 0.0
    %1815 = vmatprep.subr.mxu0 0.0
    %1816 = vmatpush1.msra.mxu0 0.0
    %1817 = vmatprep.subr.mxu0 0.0
    %1818 = vmatpush1.msra.mxu0 0.0
    %1819 = vmatprep.subr.mxu0 0.0
    %1820 = vmatpush1.msra.mxu0 0.0
    %1821 = vmatprep.subr.mxu0 0.0
    %1822 = vmatpush1.msra.mxu0 0.0
    %1823 = vmatprep.subr.mxu0 0.0
    %1824 = vmatpush1.msra.mxu0 0.0
    %1825 = vmatprep.subr.mxu0 0.0
    %1826 = vmatpush1.msra.mxu0 0.0
    %1827 = vmatprep.subr.mxu0 0.0
    %1828 = vmatpush1.msra.mxu0 0.0
    %1829 = vmatprep.subr.mxu0 0.0
    %1830 = vmatpush1.msra.mxu0 0.0
    %1831 = vmatprep.subr.mxu0 0.0
    %1832 = vmatpush1.msra.mxu0 0.0
    %1833 = vmatprep.subr.mxu0 0.0
    %1834 = vmatpush1.msra.mxu0 0.0
    %1835 = vmatprep.subr.mxu0 0.0
    %1836 = vmatpush1.msra.mxu0 %v264
    %1837 = vmatprep.subr.mxu0 0.0
    %1838 = vmatpush1.msra.mxu0 %v263
    %1839 = vmatprep.subr.mxu0 0.0
    %1840 = vmatpush1.msra.mxu0 %v262
    %1841 = vmatprep.subr.mxu0 0.0
    %1842 = vmatpush1.msra.mxu0 %v261
    %1843 = vmatprep.subr.mxu0 0.0
    %1844 = vmatpush2.msra.mxu0 0.0
    %1845 = vmatprep.subr.mxu0 0.0
    %1846 = vmatpush2.msra.mxu0 0.0
    %1847 = vmatprep.subr.mxu0 0.0
    %1848 = vmatpush2.msra.mxu0 0.0
    %1849 = vmatprep.subr.mxu0 0.0
    %1850 = vmatpush2.msra.mxu0 0.0
    %1851 = vmatprep.subr.mxu0 0.0
    %1852 = vmatpush2.msra.mxu0 0.0
    %1853 = vmatprep.subr.mxu0 0.0
    %1854 = vmatpush2.msra.mxu0 0.0
    %1855 = vmatprep.subr.mxu0 0.0
    %1856 = vmatpush2.msra.mxu0 0.0
    %1857 = vmatprep.subr.mxu0 0.0
    %1858 = vmatpush2.msra.mxu0 0.0
    %1859 = vmatprep.subr.mxu0 0.0
    %1860 = vmatpush2.msra.mxu0 0.0
    %1861 = vmatprep.subr.mxu0 0.0
    %1862 = vmatpush2.msra.mxu0 0.0
    %1863 = vmatprep.subr.mxu0 0.0
    %1864 = vmatpush2.msra.mxu0 0.0
    %1865 = vmatprep.subr.mxu0 0.0
    %1866 = vmatpush2.msra.mxu0 0.0
    %1867 = vmatprep.subr.mxu0 0.0
    %1868 = vmatpush2.msra.mxu0 0.0
    %1869 = vmatprep.subr.mxu0 0.0
    %1870 = vmatpush2.msra.mxu0 0.0
    %1871 = vmatprep.subr.mxu0 0.0
    %1872 = vmatpush2.msra.mxu0 0.0
    %1873 = vmatprep.subr.mxu0 0.0
    %1874 = vmatpush2.msra.mxu0 0.0
    %1875 = vmatprep.mubr.f32.mxu0 0.0
    %1876 = vmatmul.mubr.f32.gmra.mxu0 %v1809
    %v1877 = vpop.f32.mrf.mxu0
    %v1878 = vadd.f32 0.0, %v1877
    %v1879 = vpop.f32.mrf.mxu0
    %1880 = vdwg.mxu0
    %v1881 = vadd.f32 %v1808, %v1878
    %v1882 = vxor.u32 %v1807, 2147483648
    %v1883 = vmul.f32 %v1882, 1.442695
    %v1884 = vpow.pop %v1883
    %v1885 = vadd.f32 %v1884, 1.0
    %v1886 = vrcp.pop %v1885
    %v1887 = vmul.f32 1.0, %v1886
    %v1888 = vtanh.pop %v1807
    %v1889 = vmul.f32 %v1887, %v1690
    %1891 = vrot.lane.b32.xlu0 %v1888, 64
    %v1892 = vpop.permute.xlu0 %1891
    %v1894 = vmul.f32 %v1887, %v1892
    %1896 = vrot.lane.b32.xlu0 %v1894, 32
    %v1897 = vpop.permute.xlu0 %1896
    %v1899 = vadd.f32 %v1889, %v1897
    %v1900 = vtanh.pop %v1899
    %1902 = vrot.lane.b32.xlu0 %v1900, 64
    %v1903 = vpop.permute.xlu0 %1902
    %v1905 = vmul.f32 %v1887, %v1903
    %v1906 = vxor.u32 %v1881, 2147483648
    %v1907 = vmul.f32 %v1906, 1.442695
    %v1908 = vpow.pop %v1907
    %v1909 = vadd.f32 %v1908, 1.0
    %v1910 = vrcp.pop %v1909
    %v1911 = vmul.f32 1.0, %v1910
    %v1912 = vtanh.pop %v1881
    %v1913 = vmul.f32 %v1911, %v1714
    %1915 = vrot.lane.b32.xlu0 %v1912, 64
    %v1916 = vpop.permute.xlu0 %1915
    %v1918 = vmul.f32 %v1911, %v1916
    %1920 = vrot.lane.b32.xlu0 %v1918, 32
    %v1921 = vpop.permute.xlu0 %1920
    %v1923 = vadd.f32 %v1913, %v1921
    %v1924 = vtanh.pop %v1923
    %1926 = vrot.lane.b32.xlu0 %v1924, 64
    %v1927 = vpop.permute.xlu0 %1926
    %v1929 = vmul.f32 %v1911, %v1927
    %1931 = vrot.lane.b32.xlu0 %v1905, 32
    %v1932 = vpop.permute.xlu0 %1931
    %s1934 = scalar_lea.vmem [#allocation12], 56
    %1935 = vst.msk [vmem:[%s1934] sm:$0xff] %vm266, %v1932
    %1937 = vrot.lane.b32.xlu0 %v1929, 32
    %v1938 = vpop.permute.xlu0 %1937
    %1940 = vst.msk [vmem:[#allocation13] sm:$0xff] %vm266, %v1938
    // Predicated region
    $region38: #{tpu_custom_call.1} parent=1 // pred_check
      _
    $region39: #{tpu_custom_call.1} parent=1 // pred_check_branch
      %1942 = sbr.rel (0) target = $region41
    $region40: #{tpu_custom_call.1} parent=1 // pred_region
      %s1944 = ssub.s32 1024, 1024
      %1945 = vsyncadd [#allocation6], %s1944
      %s1946 = sshll.u32 [#allocation12], 4
      %s1947 = int_to_ptr.vmem [resolvable:$true] %s1946
      %1952 = dma.vmem_to_hbm [thread:$0]  %s1947, 1024, %s5, [#allocation6], 128, 128, 8
    $region41: #{tpu_custom_call.1} parent=1 // pred_fallthru
      _
    // Predicated region
    $region42: #{tpu_custom_call.1} parent=1 // pred_check
      _
    $region43: #{tpu_custom_call.1} parent=1 // pred_check_branch
      %1954 = sbr.rel (0) target = $region45
    $region44: #{tpu_custom_call.1} parent=1 // pred_region
      %s1956 = ssub.s32 1024, 1024
      %1957 = vsyncadd [#allocation14], %s1956
      %s1958 = sshll.u32 [#allocation13], 4
      %s1959 = int_to_ptr.vmem [resolvable:$true] %s1958
      %1964 = dma.vmem_to_hbm [thread:$0]  %s1959, 1024, %s6, [#allocation14], 128, 128, 8
    $region45: #{tpu_custom_call.1} parent=1 // pred_fallthru
      _
    // Predicated region
    $region46: #{tpu_custom_call.1} parent=1 // pred_check
      _
    $region47: #{tpu_custom_call.1} parent=1 // pred_check_branch
      %1966 = sbr.rel (0) target = $region49
    $region48: #{tpu_custom_call.1} parent=1 // pred_region
      %1967 = dma.done [#allocation6], 1024
    $region49: #{tpu_custom_call.1} parent=1 // pred_fallthru
      _
    // Predicated region
    $region50: #{tpu_custom_call.1} parent=1 // pred_check
      _
    $region51: #{tpu_custom_call.1} parent=1 // pred_check_branch
      %1969 = sbr.rel (0) target = $region53
    $region52: #{tpu_custom_call.1} parent=1 // pred_region
      %1970 = dma.done [#allocation14], 1024
    $region53: #{tpu_custom_call.1} parent=1 // pred_fallthru
      _
    %1971 = vsyncpa [#allocation5], 1
    %1972 = vsyncpa [#allocation8], 1
    %1973 = vsyncpa [#allocation11], 1
    %1974 = vsyncpa [#allocation6], 1
    %1975 = vsyncpa [#allocation14], 1

</llo_original>
